<compile_context>
chip_gen: v5e
topology: v5e:2x2
jax: 0.10.0
libtpu: 0.0.40
codegen_flags: <defaults>
</compile_context>

<pallas_src>
import numpy as np
import jax
import jax.numpy as jnp
from jax.experimental import pallas as pl
from jax.experimental.pallas import tpu as pltpu

# ---- hyperparameters (mirror CharGenerator.__init__) ------------------------
HL_SIZE = 32          # size of hidden layer of main LSTM (external context)
EMB_SIZE = 16         # character embedding size
NCHAR = 40            # number of characters (embedding has NCHAR+1 rows)
NCHAR_PAD = 128       # decoder output padded to a full 128-lane tile
NHID = 32             # char-LSTM hidden size
NLAYERS = 2           # kernel below is written for exactly 2 layers
DROPOUT = 0.0         # TODO(synk): dropout implemented as identity (inference / p=0)
SEQ = 8
BATCH = 4
NINP = HL_SIZE + EMB_SIZE
G = 4 * NHID          # gate width (128) == lane width of all slabs

assert NLAYERS == 2, "kernel is specialized for 2 LSTM layers"
assert G == 128 and NCHAR_PAD == 128

# fused weight-slab row offsets (all multiples of 8)
_OFF_WIH0 = 0                       # (128, 128)  x -> gates, rows >= NINP are zero
_OFF_WREC = 128                     # (128, 128)  [whh0; wih1; whh1; 0]
_OFF_BIAS = 256                     # (8, 128)    rows 0-3 = b0, rows 4-7 = b1
_OFF_WDEC = 264                     # (32, 128)   decoder weight, lanes >= NCHAR zero
_OFF_BDEC = 296                     # (8, 128)    row 0 = decoder bias
_SLAB_ROWS = 304


# ---- Pallas kernel -----------------------------------------------------------
def _char_gen_kernel(x_ref, state_ref, slab_ref, logits_ref, state_out_ref):
    """Skew-fused 2-layer LSTM over the full sequence + linear decoder, all in VMEM.

    x_ref:     (seq*2*bsz, 128)  layer-0 inputs, 2*bsz rows per step (rows bsz..2bsz-1
                                 zero), lanes >= NINP zero.
    state_ref: (4*bsz, nhid)     [h0_l0; h0_l1; c0_l0; c0_l1]
    slab_ref:  (304, 128)        fused weights/biases (see offsets above)
    logits_ref:(seq*bsz, 128)    lane-dense decoder output (padded beyond NCHAR)
    state_out_ref: (4*bsz, nhid) [hn_l0; hn_l1; cn_l0; cn_l1]
    """
    nhid = state_ref.shape[1]
    bsz = state_ref.shape[0] // 4
    rps = 2 * bsz                              # rows per fused step
    nsteps = x_ref.shape[0] // rps

    # ---- static slab slices (one DMA'd input, zero-cost views) --------------
    wih0 = slab_ref[_OFF_WIH0:_OFF_WIH0 + 128, :]          # (128, G)
    w_rec = slab_ref[_OFF_WREC:_OFF_WREC + 128, :]         # (128, G)
    bias_c = slab_ref[_OFF_BIAS:_OFF_BIAS + rps, :]        # (2*bsz, G)
    wdec = slab_ref[_OFF_WDEC:_OFF_WDEC + nhid, :]         # (nhid, G)
    bdec = slab_ref[_OFF_BDEC:_OFF_BDEC + 1, :]            # (1, G)

    # ---- hoisted layer-0 input projection over the whole sequence -----------
    # x rows are laid out 2*bsz per step (bsz real + bsz zero rows), so the per-step
    # slices below are sublane-tile aligned and the zero rows pick up b1 for free.
    gxb = jnp.dot(x_ref[...], wih0, preferred_element_type=jnp.float32)
    gxb = gxb + jnp.tile(bias_c, (nsteps, 1))              # (nsteps*2*bsz, G)

    # ---- initial state, kept entirely in vregs -------------------------------
    h0 = state_ref[0 * bsz:1 * bsz, :]                     # layer-0 hidden
    h1 = state_ref[1 * bsz:2 * bsz, :]                     # layer-1 hidden
    c0 = state_ref[2 * bsz:3 * bsz, :]
    c1 = state_ref[3 * bsz:4 * bsz, :]
    z = jnp.zeros((bsz, nhid), jnp.float32)

    ys = []
    # Skew-fused recurrence: iteration s = layer-0 step s (rows 0..bsz-1) and
    # layer-1 step s-1 (rows bsz..2bsz-1) in one MXU push + one sigmoid + one tanh.
    for s in range(nsteps + 1):
        top = jnp.concatenate([h0, z, z, z], axis=1)       # [h0 |  0 |  0 | 0]
        bot = jnp.concatenate([z, h0, h1, z], axis=1)      # [ 0 | h0 | h1 | 0]
        sx = jnp.concatenate([top, bot], axis=0)           # (2*bsz, G)
        gx_s = gxb[rps * s:rps * (s + 1), :] if s < nsteps else bias_c
        gates = gx_s + jnp.dot(sx, w_rec, preferred_element_type=jnp.float32)
        sg = jax.nn.sigmoid(gates)                         # one full-width EUP push
        th = jnp.tanh(gates)                               # one full-width EUP push
        i_g = sg[:, 0 * nhid:1 * nhid]
        f_g = sg[:, 1 * nhid:2 * nhid]
        g_g = th[:, 2 * nhid:3 * nhid]
        o_g = sg[:, 3 * nhid:4 * nhid]
        c_in = jnp.concatenate([c0, c1], axis=0)           # (2*bsz, nhid)
        c_new = f_g * c_in + i_g * g_g
        h_new = o_g * jnp.tanh(c_new)
        if s < nsteps:            # commit layer-0 step s (skipped at epilogue)
            h0 = h_new[0:bsz, :]
            c0 = c_new[0:bsz, :]
        if s >= 1:                # commit layer-1 step s-1 (skipped at prologue)
            h1 = h_new[bsz:2 * bsz, :]
            c1 = c_new[bsz:2 * bsz, :]
            ys.append(h1)

    # ---- decoder over all layer-1 outputs, one lane-dense slab write ---------
    y = jnp.concatenate(ys, axis=0)                        # (nsteps*bsz, nhid)
    logits_ref[...] = jnp.dot(y, wdec, preferred_element_type=jnp.float32) + bdec

    # ---- final states packed into a single 2-D output ------------------------
    state_out_ref[...] = jnp.concatenate([h0, h1, c0, c1], axis=0)


# ---- wrapper -----------------------------------------------------------------
def char_generator_forward(inp_ids, hidden_lstm, hidden, params):
    """Mirrors CharGenerator.forward(input, hidden_lstm, hidden)."""
    h0, c0 = hidden
    seq, bsz = inp_ids.shape
    assert bsz == BATCH, "demo kernel layout is built for BATCH rows per layer"

    # --- glue (plain JAX): embedding + hidden_lstm cat/reshape + concat -------
    emb = params["emb"][inp_ids]                                      # (seq, bsz, emb)
    # Matches torch.cat([hidden_lstm] * bsz).reshape(seq, bsz, -1) exactly.
    hl = jnp.concatenate([hidden_lstm] * bsz, axis=0).reshape(seq, bsz, -1)
    x = jnp.concatenate([emb, hl], axis=2).astype(jnp.float32)        # (seq, bsz, ninp)

    # pad batch bsz -> 2*bsz rows per step and ninp -> 128 lanes (tile-aligned slab)
    xpad = jnp.zeros((seq, 2 * bsz, 128), jnp.float32)
    xpad = xpad.at[:, :bsz, :NINP].set(x)
    xpad = xpad.reshape(seq * 2 * bsz, 128)

    state_in = jnp.concatenate(
        [h0.reshape(NLAYERS * bsz, NHID), c0.reshape(NLAYERS * bsz, NHID)], axis=0)

    vmem = pl.BlockSpec(memory_space=pltpu.MemorySpace.VMEM)
    logits_pad, state_out = pl.pallas_call(
        _char_gen_kernel,
        out_shape=(
            jax.ShapeDtypeStruct((seq * bsz, NCHAR_PAD), jnp.float32),   # lane-dense
            jax.ShapeDtypeStruct((2 * NLAYERS * bsz, NHID), jnp.float32),
        ),
        in_specs=[vmem, vmem, vmem],
        out_specs=(vmem, vmem),
    )(xpad, state_in, params["slab"])

    # drop the lane padding + restore shapes — free layout plumbing
    logits = logits_pad[:, :NCHAR].reshape(seq, bsz, NCHAR)
    hn = state_out[:NLAYERS * bsz].reshape(NLAYERS, bsz, NHID)
    cn = state_out[NLAYERS * bsz:].reshape(NLAYERS, bsz, NHID)
    return logits, (hn, cn)


# ---- deterministic parameter init (shapes from CharGenerator.__init__) -------
def init_params(key):
    ks = jax.random.split(key, 12)
    initrange = 0.1
    stdv = 1.0 / np.sqrt(NHID)

    def u(k, shape, a):
        return jax.random.uniform(k, shape, jnp.float32, -a, a)

    emb = u(ks[0], (NCHAR + 1, EMB_SIZE), initrange)          # nn.Embedding(nchar+1, emb)
    wih0 = u(ks[1], (4 * NHID, NINP), stdv)                    # PyTorch weight_ih_l0
    whh0 = u(ks[2], (4 * NHID, NHID), stdv)
    bih0 = u(ks[3], (4 * NHID,), stdv)
    bhh0 = u(ks[4], (4 * NHID,), stdv)
    wih1 = u(ks[5], (4 * NHID, NHID), stdv)                    # PyTorch weight_ih_l1
    whh1 = u(ks[6], (4 * NHID, NHID), stdv)
    bih1 = u(ks[7], (4 * NHID,), stdv)
    bhh1 = u(ks[8], (4 * NHID,), stdv)
    wdec = u(ks[9], (NCHAR, NHID), initrange)                  # decoder.weight
    bdec = jnp.zeros((NCHAR,), jnp.float32)                    # decoder.bias.fill_(0)

    wih0_t, whh0_t = wih0.T, whh0.T
    wih1_t, whh1_t = wih1.T, whh1.T
    b0 = (bih0 + bhh0).reshape(1, -1)
    b1 = (bih1 + bhh1).reshape(1, -1)
    wdec_t = wdec.T                                            # (NHID, NCHAR)

    # ---- fused (304, 128) weight/bias slab ------------------------------------
    wih0_pad = jnp.zeros((128, G), jnp.float32).at[:NINP].set(wih0_t)
    w_rec = (jnp.zeros((128, G), jnp.float32)
             .at[0 * NHID:1 * NHID].set(whh0_t)
             .at[1 * NHID:2 * NHID].set(wih1_t)
             .at[2 * NHID:3 * NHID].set(whh1_t))
    bias_c = jnp.concatenate([jnp.tile(b0, (BATCH, 1)),
                              jnp.tile(b1, (BATCH, 1))], axis=0)            # (8, 128)
    wdec_pad = jnp.zeros((NHID, NCHAR_PAD), jnp.float32).at[:, :NCHAR].set(wdec_t)
    bdec_pad = jnp.zeros((8, NCHAR_PAD), jnp.float32).at[0, :NCHAR].set(bdec)
    slab = jnp.concatenate([wih0_pad, w_rec, bias_c, wdec_pad, bdec_pad], axis=0)
    assert slab.shape == (_SLAB_ROWS, 128)

    return {
        "emb": emb, "slab": slab,
        # un-fused copies kept only for the pure-JAX reference check:
        "wih0_t": wih0_t, "whh0_t": whh0_t, "b0": b0,
        "wih1_t": wih1_t, "whh1_t": whh1_t, "b1": b1,
        "wdec_t": wdec_t, "bdec": bdec.reshape(1, -1),
    }


# ---- pure-JAX reference for correctness check ---------------------------------
def ref_forward(x, h0, c0, params):
    layer_in = x
    hn, cn = [], []
    for l in range(NLAYERS):
        wih, whh, b = params[f"wih{l}_t"], params[f"whh{l}_t"], params[f"b{l}"]
        h, c = h0[l], c0[l]
        outs = []
        for t in range(x.shape[0]):
            gates = layer_in[t] @ wih + h @ whh + b
            i = jax.nn.sigmoid(gates[:, :NHID])
            f = jax.nn.sigmoid(gates[:, NHID:2 * NHID])
            g = jnp.tanh(gates[:, 2 * NHID:3 * NHID])
            o = jax.nn.sigmoid(gates[:, 3 * NHID:])
            c = f * c + i * g
            h = o * jnp.tanh(c)
            outs.append(h)
        layer_in = jnp.stack(outs)
        hn.append(h)
        cn.append(c)
    logits = layer_in @ params["wdec_t"] + params["bdec"]
    return logits, jnp.stack(hn), jnp.stack(cn)


if __name__ == "__main__":
    key = jax.random.PRNGKey(0)
    kp, ki, kh, ks = jax.random.split(key, 4)
    params = init_params(kp)

    # forward(input, hidden_lstm, hidden)
    inp = jax.random.randint(ki, (SEQ, BATCH), 0, NCHAR + 1, dtype=jnp.int32)
    hidden_lstm = jax.random.normal(kh, (SEQ, HL_SIZE), jnp.float32)
    # use non-zero initial state to exercise the full recurrence path
    h0 = 0.1 * jax.random.normal(ks, (NLAYERS, BATCH, NHID), jnp.float32)
    c0 = jnp.zeros((NLAYERS, BATCH, NHID), jnp.float32)

    logits, (hn, cn) = char_generator_forward(inp, hidden_lstm, (h0, c0), params)
    jax.block_until_ready((logits, hn, cn))

    # sanity check against a pure-JAX reference
    emb = params["emb"][inp]
    hl = jnp.concatenate([hidden_lstm] * BATCH, axis=0).reshape(SEQ, BATCH, -1)
    x = jnp.concatenate([emb, hl], axis=2)
    rl, rh, rc = ref_forward(x, h0, c0, params)
    np.testing.assert_allclose(np.asarray(logits), np.asarray(rl), atol=2e-3, rtol=2e-3)
    np.testing.assert_allclose(np.asarray(hn), np.asarray(rh), atol=2e-3, rtol=2e-3)
    np.testing.assert_allclose(np.asarray(cn), np.asarray(rc), atol=2e-3, rtol=2e-3)

    print("KERNEL_OK")
</pallas_src>

<mosaic_0001>
module attributes {stable_mosaic.version = 11 : i64} {
  func.func @_char_gen_kernel(%arg0: memref<64x128xf32, #tpu.memory_space<vmem>>, %arg1: memref<16x32xf32, #tpu.memory_space<vmem>>, %arg2: memref<304x128xf32, #tpu.memory_space<vmem>>, %arg3: memref<32x128xf32, #tpu.memory_space<vmem>>, %arg4: memref<16x32xf32, #tpu.memory_space<vmem>>) attributes {dimension_semantics = [], scalar_prefetch = 0 : i64, scratch_operands = 0 : i64, tpu.core_type = #tpu.core_type<tc>} {
    %c0 = arith.constant 0 : index
    %c0_0 = arith.constant 0 : index
    %0 = vector.load %arg2[%c0, %c0_0] : memref<304x128xf32, #tpu.memory_space<vmem>>, vector<128x128xf32>
    %c128 = arith.constant 128 : index
    %c0_1 = arith.constant 0 : index
    %1 = vector.load %arg2[%c128, %c0_1] : memref<304x128xf32, #tpu.memory_space<vmem>>, vector<128x128xf32>
    %c256 = arith.constant 256 : index
    %c0_2 = arith.constant 0 : index
    %2 = vector.load %arg2[%c256, %c0_2] : memref<304x128xf32, #tpu.memory_space<vmem>>, vector<8x128xf32>
    %c264 = arith.constant 264 : index
    %c0_3 = arith.constant 0 : index
    %3 = vector.load %arg2[%c264, %c0_3] : memref<304x128xf32, #tpu.memory_space<vmem>>, vector<32x128xf32>
    %c296 = arith.constant 296 : index
    %c0_4 = arith.constant 0 : index
    %4 = vector.load %arg2[%c296, %c0_4] : memref<304x128xf32, #tpu.memory_space<vmem>>, vector<1x128xf32>
    %c0_5 = arith.constant 0 : index
    %c0_6 = arith.constant 0 : index
    %5 = vector.load %arg0[%c0_5, %c0_6] : memref<64x128xf32, #tpu.memory_space<vmem>>, vector<64x128xf32>
    %cst = arith.constant dense<0.000000e+00> : vector<64x128xf32>
    %6 = tpu.matmul %5, %0, %cst {dimension_numbers = #tpu.dot_dimension_numbers<[1], [0], [0], [1], [0, 0, 1, 1], [], []>} : vector<64x128xf32>, vector<128x128xf32>, vector<64x128xf32> -> vector<64x128xf32>
    %7 = tpu.concatenate %2, %2, %2, %2, %2, %2, %2, %2 in 0 : vector<8x128xf32>, vector<8x128xf32>, vector<8x128xf32>, vector<8x128xf32>, vector<8x128xf32>, vector<8x128xf32>, vector<8x128xf32>, vector<8x128xf32> -> vector<64x128xf32>
    %8 = arith.addf %6, %7 : vector<64x128xf32>
    %c0_7 = arith.constant 0 : index
    %c0_8 = arith.constant 0 : index
    %9 = vector.load %arg1[%c0_7, %c0_8] : memref<16x32xf32, #tpu.memory_space<vmem>>, vector<4x32xf32>
    %c4 = arith.constant 4 : index
    %c0_9 = arith.constant 0 : index
    %10 = vector.load %arg1[%c4, %c0_9] : memref<16x32xf32, #tpu.memory_space<vmem>>, vector<4x32xf32>
    %c8 = arith.constant 8 : index
    %c0_10 = arith.constant 0 : index
    %11 = vector.load %arg1[%c8, %c0_10] : memref<16x32xf32, #tpu.memory_space<vmem>>, vector<4x32xf32>
    %c12 = arith.constant 12 : index
    %c0_11 = arith.constant 0 : index
    %12 = vector.load %arg1[%c12, %c0_11] : memref<16x32xf32, #tpu.memory_space<vmem>>, vector<4x32xf32>
    %cst_12 = arith.constant 0.000000e+00 : f32
    %13 = vector.broadcast %cst_12 : f32 to vector<4x32xf32>
    %14 = tpu.concatenate %9, %13, %13, %13 in 1 : vector<4x32xf32>, vector<4x32xf32>, vector<4x32xf32>, vector<4x32xf32> -> vector<4x128xf32>
    %15 = tpu.concatenate %13, %9, %10, %13 in 1 : vector<4x32xf32>, vector<4x32xf32>, vector<4x32xf32>, vector<4x32xf32> -> vector<4x128xf32>
    %16 = tpu.concatenate %14, %15 in 0 : vector<4x128xf32>, vector<4x128xf32> -> vector<8x128xf32>
    %17 = vector.extract_strided_slice %8 {offsets = [0, 0], sizes = [8, 128], strides = [1, 1]} : vector<64x128xf32> to vector<8x128xf32>
    %cst_13 = arith.constant dense<0.000000e+00> : vector<8x128xf32>
    %18 = tpu.matmul %16, %1, %cst_13 {dimension_numbers = #tpu.dot_dimension_numbers<[1], [0], [0], [1], [0, 0, 1, 1], [], []>} : vector<8x128xf32>, vector<128x128xf32>, vector<8x128xf32> -> vector<8x128xf32>
    %19 = arith.addf %17, %18 : vector<8x128xf32>
    %20 = arith.negf %19 : vector<8x128xf32>
    %21 = math.exp %20 : vector<8x128xf32>
    %cst_14 = arith.constant 1.000000e+00 : f32
    %22 = vector.broadcast %cst_14 : f32 to vector<8x128xf32>
    %23 = arith.addf %22, %21 : vector<8x128xf32>
    %24 = arith.divf %22, %23 : vector<8x128xf32>
    %25 = math.tanh %19 : vector<8x128xf32>
    %26 = vector.extract_strided_slice %24 {offsets = [0, 0], sizes = [8, 32], strides = [1, 1]} : vector<8x128xf32> to vector<8x32xf32>
    %27 = vector.extract_strided_slice %24 {offsets = [0, 32], sizes = [8, 32], strides = [1, 1]} : vector<8x128xf32> to vector<8x32xf32>
    %28 = vector.extract_strided_slice %25 {offsets = [0, 64], sizes = [8, 32], strides = [1, 1]} : vector<8x128xf32> to vector<8x32xf32>
    %29 = vector.extract_strided_slice %24 {offsets = [0, 96], sizes = [8, 32], strides = [1, 1]} : vector<8x128xf32> to vector<8x32xf32>
    %30 = tpu.concatenate %11, %12 in 0 : vector<4x32xf32>, vector<4x32xf32> -> vector<8x32xf32>
    %31 = arith.mulf %27, %30 : vector<8x32xf32>
    %32 = arith.mulf %26, %28 : vector<8x32xf32>
    %33 = arith.addf %31, %32 : vector<8x32xf32>
    %34 = math.tanh %33 : vector<8x32xf32>
    %35 = arith.mulf %29, %34 : vector<8x32xf32>
    %36 = vector.extract_strided_slice %35 {offsets = [0, 0], sizes = [4, 32], strides = [1, 1]} : vector<8x32xf32> to vector<4x32xf32>
    %37 = vector.extract_strided_slice %33 {offsets = [0, 0], sizes = [4, 32], strides = [1, 1]} : vector<8x32xf32> to vector<4x32xf32>
    %38 = tpu.concatenate %36, %13, %13, %13 in 1 : vector<4x32xf32>, vector<4x32xf32>, vector<4x32xf32>, vector<4x32xf32> -> vector<4x128xf32>
    %39 = tpu.concatenate %13, %36, %10, %13 in 1 : vector<4x32xf32>, vector<4x32xf32>, vector<4x32xf32>, vector<4x32xf32> -> vector<4x128xf32>
    %40 = tpu.concatenate %38, %39 in 0 : vector<4x128xf32>, vector<4x128xf32> -> vector<8x128xf32>
    %41 = vector.extract_strided_slice %8 {offsets = [8, 0], sizes = [8, 128], strides = [1, 1]} : vector<64x128xf32> to vector<8x128xf32>
    %cst_15 = arith.constant dense<0.000000e+00> : vector<8x128xf32>
    %42 = tpu.matmul %40, %1, %cst_15 {dimension_numbers = #tpu.dot_dimension_numbers<[1], [0], [0], [1], [0, 0, 1, 1], [], []>} : vector<8x128xf32>, vector<128x128xf32>, vector<8x128xf32> -> vector<8x128xf32>
    %43 = arith.addf %41, %42 : vector<8x128xf32>
    %44 = arith.negf %43 : vector<8x128xf32>
    %45 = math.exp %44 : vector<8x128xf32>
    %cst_16 = arith.constant 1.000000e+00 : f32
    %46 = vector.broadcast %cst_16 : f32 to vector<8x128xf32>
    %47 = arith.addf %46, %45 : vector<8x128xf32>
    %48 = arith.divf %46, %47 : vector<8x128xf32>
    %49 = math.tanh %43 : vector<8x128xf32>
    %50 = vector.extract_strided_slice %48 {offsets = [0, 0], sizes = [8, 32], strides = [1, 1]} : vector<8x128xf32> to vector<8x32xf32>
    %51 = vector.extract_strided_slice %48 {offsets = [0, 32], sizes = [8, 32], strides = [1, 1]} : vector<8x128xf32> to vector<8x32xf32>
    %52 = vector.extract_strided_slice %49 {offsets = [0, 64], sizes = [8, 32], strides = [1, 1]} : vector<8x128xf32> to vector<8x32xf32>
    %53 = vector.extract_strided_slice %48 {offsets = [0, 96], sizes = [8, 32], strides = [1, 1]} : vector<8x128xf32> to vector<8x32xf32>
    %54 = tpu.concatenate %37, %12 in 0 : vector<4x32xf32>, vector<4x32xf32> -> vector<8x32xf32>
    %55 = arith.mulf %51, %54 : vector<8x32xf32>
    %56 = arith.mulf %50, %52 : vector<8x32xf32>
    %57 = arith.addf %55, %56 : vector<8x32xf32>
    %58 = math.tanh %57 : vector<8x32xf32>
    %59 = arith.mulf %53, %58 : vector<8x32xf32>
    %60 = vector.extract_strided_slice %59 {offsets = [0, 0], sizes = [4, 32], strides = [1, 1]} : vector<8x32xf32> to vector<4x32xf32>
    %61 = vector.extract_strided_slice %57 {offsets = [0, 0], sizes = [4, 32], strides = [1, 1]} : vector<8x32xf32> to vector<4x32xf32>
    %62 = vector.extract_strided_slice %59 {offsets = [4, 0], sizes = [4, 32], strides = [1, 1]} : vector<8x32xf32> to vector<4x32xf32>
    %63 = vector.extract_strided_slice %57 {offsets = [4, 0], sizes = [4, 32], strides = [1, 1]} : vector<8x32xf32> to vector<4x32xf32>
    %64 = tpu.concatenate %60, %13, %13, %13 in 1 : vector<4x32xf32>, vector<4x32xf32>, vector<4x32xf32>, vector<4x32xf32> -> vector<4x128xf32>
    %65 = tpu.concatenate %13, %60, %62, %13 in 1 : vector<4x32xf32>, vector<4x32xf32>, vector<4x32xf32>, vector<4x32xf32> -> vector<4x128xf32>
    %66 = tpu.concatenate %64, %65 in 0 : vector<4x128xf32>, vector<4x128xf32> -> vector<8x128xf32>
    %67 = vector.extract_strided_slice %8 {offsets = [16, 0], sizes = [8, 128], strides = [1, 1]} : vector<64x128xf32> to vector<8x128xf32>
    %cst_17 = arith.constant dense<0.000000e+00> : vector<8x128xf32>
    %68 = tpu.matmul %66, %1, %cst_17 {dimension_numbers = #tpu.dot_dimension_numbers<[1], [0], [0], [1], [0, 0, 1, 1], [], []>} : vector<8x128xf32>, vector<128x128xf32>, vector<8x128xf32> -> vector<8x128xf32>
    %69 = arith.addf %67, %68 : vector<8x128xf32>
    %70 = arith.negf %69 : vector<8x128xf32>
    %71 = math.exp %70 : vector<8x128xf32>
    %cst_18 = arith.constant 1.000000e+00 : f32
    %72 = vector.broadcast %cst_18 : f32 to vector<8x128xf32>
    %73 = arith.addf %72, %71 : vector<8x128xf32>
    %74 = arith.divf %72, %73 : vector<8x128xf32>
    %75 = math.tanh %69 : vector<8x128xf32>
    %76 = vector.extract_strided_slice %74 {offsets = [0, 0], sizes = [8, 32], strides = [1, 1]} : vector<8x128xf32> to vector<8x32xf32>
    %77 = vector.extract_strided_slice %74 {offsets = [0, 32], sizes = [8, 32], strides = [1, 1]} : vector<8x128xf32> to vector<8x32xf32>
    %78 = vector.extract_strided_slice %75 {offsets = [0, 64], sizes = [8, 32], strides = [1, 1]} : vector<8x128xf32> to vector<8x32xf32>
    %79 = vector.extract_strided_slice %74 {offsets = [0, 96], sizes = [8, 32], strides = [1, 1]} : vector<8x128xf32> to vector<8x32xf32>
    %80 = tpu.concatenate %61, %63 in 0 : vector<4x32xf32>, vector<4x32xf32> -> vector<8x32xf32>
    %81 = arith.mulf %77, %80 : vector<8x32xf32>
    %82 = arith.mulf %76, %78 : vector<8x32xf32>
    %83 = arith.addf %81, %82 : vector<8x32xf32>
    %84 = math.tanh %83 : vector<8x32xf32>
    %85 = arith.mulf %79, %84 : vector<8x32xf32>
    %86 = vector.extract_strided_slice %85 {offsets = [0, 0], sizes = [4, 32], strides = [1, 1]} : vector<8x32xf32> to vector<4x32xf32>
    %87 = vector.extract_strided_slice %83 {offsets = [0, 0], sizes = [4, 32], strides = [1, 1]} : vector<8x32xf32> to vector<4x32xf32>
    %88 = vector.extract_strided_slice %85 {offsets = [4, 0], sizes = [4, 32], strides = [1, 1]} : vector<8x32xf32> to vector<4x32xf32>
    %89 = vector.extract_strided_slice %83 {offsets = [4, 0], sizes = [4, 32], strides = [1, 1]} : vector<8x32xf32> to vector<4x32xf32>
    %90 = tpu.concatenate %86, %13, %13, %13 in 1 : vector<4x32xf32>, vector<4x32xf32>, vector<4x32xf32>, vector<4x32xf32> -> vector<4x128xf32>
    %91 = tpu.concatenate %13, %86, %88, %13 in 1 : vector<4x32xf32>, vector<4x32xf32>, vector<4x32xf32>, vector<4x32xf32> -> vector<4x128xf32>
    %92 = tpu.concatenate %90, %91 in 0 : vector<4x128xf32>, vector<4x128xf32> -> vector<8x128xf32>
    %93 = vector.extract_strided_slice %8 {offsets = [24, 0], sizes = [8, 128], strides = [1, 1]} : vector<64x128xf32> to vector<8x128xf32>
    %cst_19 = arith.constant dense<0.000000e+00> : vector<8x128xf32>
    %94 = tpu.matmul %92, %1, %cst_19 {dimension_numbers = #tpu.dot_dimension_numbers<[1], [0], [0], [1], [0, 0, 1, 1], [], []>} : vector<8x128xf32>, vector<128x128xf32>, vector<8x128xf32> -> vector<8x128xf32>
    %95 = arith.addf %93, %94 : vector<8x128xf32>
    %96 = arith.negf %95 : vector<8x128xf32>
    %97 = math.exp %96 : vector<8x128xf32>
    %cst_20 = arith.constant 1.000000e+00 : f32
    %98 = vector.broadcast %cst_20 : f32 to vector<8x128xf32>
    %99 = arith.addf %98, %97 : vector<8x128xf32>
    %100 = arith.divf %98, %99 : vector<8x128xf32>
    %101 = math.tanh %95 : vector<8x128xf32>
    %102 = vector.extract_strided_slice %100 {offsets = [0, 0], sizes = [8, 32], strides = [1, 1]} : vector<8x128xf32> to vector<8x32xf32>
    %103 = vector.extract_strided_slice %100 {offsets = [0, 32], sizes = [8, 32], strides = [1, 1]} : vector<8x128xf32> to vector<8x32xf32>
    %104 = vector.extract_strided_slice %101 {offsets = [0, 64], sizes = [8, 32], strides = [1, 1]} : vector<8x128xf32> to vector<8x32xf32>
    %105 = vector.extract_strided_slice %100 {offsets = [0, 96], sizes = [8, 32], strides = [1, 1]} : vector<8x128xf32> to vector<8x32xf32>
    %106 = tpu.concatenate %87, %89 in 0 : vector<4x32xf32>, vector<4x32xf32> -> vector<8x32xf32>
    %107 = arith.mulf %103, %106 : vector<8x32xf32>
    %108 = arith.mulf %102, %104 : vector<8x32xf32>
    %109 = arith.addf %107, %108 : vector<8x32xf32>
    %110 = math.tanh %109 : vector<8x32xf32>
    %111 = arith.mulf %105, %110 : vector<8x32xf32>
    %112 = vector.extract_strided_slice %111 {offsets = [0, 0], sizes = [4, 32], strides = [1, 1]} : vector<8x32xf32> to vector<4x32xf32>
    %113 = vector.extract_strided_slice %109 {offsets = [0, 0], sizes = [4, 32], strides = [1, 1]} : vector<8x32xf32> to vector<4x32xf32>
    %114 = vector.extract_strided_slice %111 {offsets = [4, 0], sizes = [4, 32], strides = [1, 1]} : vector<8x32xf32> to vector<4x32xf32>
    %115 = vector.extract_strided_slice %109 {offsets = [4, 0], sizes = [4, 32], strides = [1, 1]} : vector<8x32xf32> to vector<4x32xf32>
    %116 = tpu.concatenate %112, %13, %13, %13 in 1 : vector<4x32xf32>, vector<4x32xf32>, vector<4x32xf32>, vector<4x32xf32> -> vector<4x128xf32>
    %117 = tpu.concatenate %13, %112, %114, %13 in 1 : vector<4x32xf32>, vector<4x32xf32>, vector<4x32xf32>, vector<4x32xf32> -> vector<4x128xf32>
    %118 = tpu.concatenate %116, %117 in 0 : vector<4x128xf32>, vector<4x128xf32> -> vector<8x128xf32>
    %119 = vector.extract_strided_slice %8 {offsets = [32, 0], sizes = [8, 128], strides = [1, 1]} : vector<64x128xf32> to vector<8x128xf32>
    %cst_21 = arith.constant dense<0.000000e+00> : vector<8x128xf32>
    %120 = tpu.matmul %118, %1, %cst_21 {dimension_numbers = #tpu.dot_dimension_numbers<[1], [0], [0], [1], [0, 0, 1, 1], [], []>} : vector<8x128xf32>, vector<128x128xf32>, vector<8x128xf32> -> vector<8x128xf32>
    %121 = arith.addf %119, %120 : vector<8x128xf32>
    %122 = arith.negf %121 : vector<8x128xf32>
    %123 = math.exp %122 : vector<8x128xf32>
    %cst_22 = arith.constant 1.000000e+00 : f32
    %124 = vector.broadcast %cst_22 : f32 to vector<8x128xf32>
    %125 = arith.addf %124, %123 : vector<8x128xf32>
    %126 = arith.divf %124, %125 : vector<8x128xf32>
    %127 = math.tanh %121 : vector<8x128xf32>
    %128 = vector.extract_strided_slice %126 {offsets = [0, 0], sizes = [8, 32], strides = [1, 1]} : vector<8x128xf32> to vector<8x32xf32>
    %129 = vector.extract_strided_slice %126 {offsets = [0, 32], sizes = [8, 32], strides = [1, 1]} : vector<8x128xf32> to vector<8x32xf32>
    %130 = vector.extract_strided_slice %127 {offsets = [0, 64], sizes = [8, 32], strides = [1, 1]} : vector<8x128xf32> to vector<8x32xf32>
    %131 = vector.extract_strided_slice %126 {offsets = [0, 96], sizes = [8, 32], strides = [1, 1]} : vector<8x128xf32> to vector<8x32xf32>
    %132 = tpu.concatenate %113, %115 in 0 : vector<4x32xf32>, vector<4x32xf32> -> vector<8x32xf32>
    %133 = arith.mulf %129, %132 : vector<8x32xf32>
    %134 = arith.mulf %128, %130 : vector<8x32xf32>
    %135 = arith.addf %133, %134 : vector<8x32xf32>
    %136 = math.tanh %135 : vector<8x32xf32>
    %137 = arith.mulf %131, %136 : vector<8x32xf32>
    %138 = vector.extract_strided_slice %137 {offsets = [0, 0], sizes = [4, 32], strides = [1, 1]} : vector<8x32xf32> to vector<4x32xf32>
    %139 = vector.extract_strided_slice %135 {offsets = [0, 0], sizes = [4, 32], strides = [1, 1]} : vector<8x32xf32> to vector<4x32xf32>
    %140 = vector.extract_strided_slice %137 {offsets = [4, 0], sizes = [4, 32], strides = [1, 1]} : vector<8x32xf32> to vector<4x32xf32>
    %141 = vector.extract_strided_slice %135 {offsets = [4, 0], sizes = [4, 32], strides = [1, 1]} : vector<8x32xf32> to vector<4x32xf32>
    %142 = tpu.concatenate %138, %13, %13, %13 in 1 : vector<4x32xf32>, vector<4x32xf32>, vector<4x32xf32>, vector<4x32xf32> -> vector<4x128xf32>
    %143 = tpu.concatenate %13, %138, %140, %13 in 1 : vector<4x32xf32>, vector<4x32xf32>, vector<4x32xf32>, vector<4x32xf32> -> vector<4x128xf32>
    %144 = tpu.concatenate %142, %143 in 0 : vector<4x128xf32>, vector<4x128xf32> -> vector<8x128xf32>
    %145 = vector.extract_strided_slice %8 {offsets = [40, 0], sizes = [8, 128], strides = [1, 1]} : vector<64x128xf32> to vector<8x128xf32>
    %cst_23 = arith.constant dense<0.000000e+00> : vector<8x128xf32>
    %146 = tpu.matmul %144, %1, %cst_23 {dimension_numbers = #tpu.dot_dimension_numbers<[1], [0], [0], [1], [0, 0, 1, 1], [], []>} : vector<8x128xf32>, vector<128x128xf32>, vector<8x128xf32> -> vector<8x128xf32>
    %147 = arith.addf %145, %146 : vector<8x128xf32>
    %148 = arith.negf %147 : vector<8x128xf32>
    %149 = math.exp %148 : vector<8x128xf32>
    %cst_24 = arith.constant 1.000000e+00 : f32
    %150 = vector.broadcast %cst_24 : f32 to vector<8x128xf32>
    %151 = arith.addf %150, %149 : vector<8x128xf32>
    %152 = arith.divf %150, %151 : vector<8x128xf32>
    %153 = math.tanh %147 : vector<8x128xf32>
    %154 = vector.extract_strided_slice %152 {offsets = [0, 0], sizes = [8, 32], strides = [1, 1]} : vector<8x128xf32> to vector<8x32xf32>
    %155 = vector.extract_strided_slice %152 {offsets = [0, 32], sizes = [8, 32], strides = [1, 1]} : vector<8x128xf32> to vector<8x32xf32>
    %156 = vector.extract_strided_slice %153 {offsets = [0, 64], sizes = [8, 32], strides = [1, 1]} : vector<8x128xf32> to vector<8x32xf32>
    %157 = vector.extract_strided_slice %152 {offsets = [0, 96], sizes = [8, 32], strides = [1, 1]} : vector<8x128xf32> to vector<8x32xf32>
    %158 = tpu.concatenate %139, %141 in 0 : vector<4x32xf32>, vector<4x32xf32> -> vector<8x32xf32>
    %159 = arith.mulf %155, %158 : vector<8x32xf32>
    %160 = arith.mulf %154, %156 : vector<8x32xf32>
    %161 = arith.addf %159, %160 : vector<8x32xf32>
    %162 = math.tanh %161 : vector<8x32xf32>
    %163 = arith.mulf %157, %162 : vector<8x32xf32>
    %164 = vector.extract_strided_slice %163 {offsets = [0, 0], sizes = [4, 32], strides = [1, 1]} : vector<8x32xf32> to vector<4x32xf32>
    %165 = vector.extract_strided_slice %161 {offsets = [0, 0], sizes = [4, 32], strides = [1, 1]} : vector<8x32xf32> to vector<4x32xf32>
    %166 = vector.extract_strided_slice %163 {offsets = [4, 0], sizes = [4, 32], strides = [1, 1]} : vector<8x32xf32> to vector<4x32xf32>
    %167 = vector.extract_strided_slice %161 {offsets = [4, 0], sizes = [4, 32], strides = [1, 1]} : vector<8x32xf32> to vector<4x32xf32>
    %168 = tpu.concatenate %164, %13, %13, %13 in 1 : vector<4x32xf32>, vector<4x32xf32>, vector<4x32xf32>, vector<4x32xf32> -> vector<4x128xf32>
    %169 = tpu.concatenate %13, %164, %166, %13 in 1 : vector<4x32xf32>, vector<4x32xf32>, vector<4x32xf32>, vector<4x32xf32> -> vector<4x128xf32>
    %170 = tpu.concatenate %168, %169 in 0 : vector<4x128xf32>, vector<4x128xf32> -> vector<8x128xf32>
    %171 = vector.extract_strided_slice %8 {offsets = [48, 0], sizes = [8, 128], strides = [1, 1]} : vector<64x128xf32> to vector<8x128xf32>
    %cst_25 = arith.constant dense<0.000000e+00> : vector<8x128xf32>
    %172 = tpu.matmul %170, %1, %cst_25 {dimension_numbers = #tpu.dot_dimension_numbers<[1], [0], [0], [1], [0, 0, 1, 1], [], []>} : vector<8x128xf32>, vector<128x128xf32>, vector<8x128xf32> -> vector<8x128xf32>
    %173 = arith.addf %171, %172 : vector<8x128xf32>
    %174 = arith.negf %173 : vector<8x128xf32>
    %175 = math.exp %174 : vector<8x128xf32>
    %cst_26 = arith.constant 1.000000e+00 : f32
    %176 = vector.broadcast %cst_26 : f32 to vector<8x128xf32>
    %177 = arith.addf %176, %175 : vector<8x128xf32>
    %178 = arith.divf %176, %177 : vector<8x128xf32>
    %179 = math.tanh %173 : vector<8x128xf32>
    %180 = vector.extract_strided_slice %178 {offsets = [0, 0], sizes = [8, 32], strides = [1, 1]} : vector<8x128xf32> to vector<8x32xf32>
    %181 = vector.extract_strided_slice %178 {offsets = [0, 32], sizes = [8, 32], strides = [1, 1]} : vector<8x128xf32> to vector<8x32xf32>
    %182 = vector.extract_strided_slice %179 {offsets = [0, 64], sizes = [8, 32], strides = [1, 1]} : vector<8x128xf32> to vector<8x32xf32>
    %183 = vector.extract_strided_slice %178 {offsets = [0, 96], sizes = [8, 32], strides = [1, 1]} : vector<8x128xf32> to vector<8x32xf32>
    %184 = tpu.concatenate %165, %167 in 0 : vector<4x32xf32>, vector<4x32xf32> -> vector<8x32xf32>
    %185 = arith.mulf %181, %184 : vector<8x32xf32>
    %186 = arith.mulf %180, %182 : vector<8x32xf32>
    %187 = arith.addf %185, %186 : vector<8x32xf32>
    %188 = math.tanh %187 : vector<8x32xf32>
    %189 = arith.mulf %183, %188 : vector<8x32xf32>
    %190 = vector.extract_strided_slice %189 {offsets = [0, 0], sizes = [4, 32], strides = [1, 1]} : vector<8x32xf32> to vector<4x32xf32>
    %191 = vector.extract_strided_slice %187 {offsets = [0, 0], sizes = [4, 32], strides = [1, 1]} : vector<8x32xf32> to vector<4x32xf32>
    %192 = vector.extract_strided_slice %189 {offsets = [4, 0], sizes = [4, 32], strides = [1, 1]} : vector<8x32xf32> to vector<4x32xf32>
    %193 = vector.extract_strided_slice %187 {offsets = [4, 0], sizes = [4, 32], strides = [1, 1]} : vector<8x32xf32> to vector<4x32xf32>
    %194 = tpu.concatenate %190, %13, %13, %13 in 1 : vector<4x32xf32>, vector<4x32xf32>, vector<4x32xf32>, vector<4x32xf32> -> vector<4x128xf32>
    %195 = tpu.concatenate %13, %190, %192, %13 in 1 : vector<4x32xf32>, vector<4x32xf32>, vector<4x32xf32>, vector<4x32xf32> -> vector<4x128xf32>
    %196 = tpu.concatenate %194, %195 in 0 : vector<4x128xf32>, vector<4x128xf32> -> vector<8x128xf32>
    %197 = vector.extract_strided_slice %8 {offsets = [56, 0], sizes = [8, 128], strides = [1, 1]} : vector<64x128xf32> to vector<8x128xf32>
    %cst_27 = arith.constant dense<0.000000e+00> : vector<8x128xf32>
    %198 = tpu.matmul %196, %1, %cst_27 {dimension_numbers = #tpu.dot_dimension_numbers<[1], [0], [0], [1], [0, 0, 1, 1], [], []>} : vector<8x128xf32>, vector<128x128xf32>, vector<8x128xf32> -> vector<8x128xf32>
    %199 = arith.addf %197, %198 : vector<8x128xf32>
    %200 = arith.negf %199 : vector<8x128xf32>
    %201 = math.exp %200 : vector<8x128xf32>
    %cst_28 = arith.constant 1.000000e+00 : f32
    %202 = vector.broadcast %cst_28 : f32 to vector<8x128xf32>
    %203 = arith.addf %202, %201 : vector<8x128xf32>
    %204 = arith.divf %202, %203 : vector<8x128xf32>
    %205 = math.tanh %199 : vector<8x128xf32>
    %206 = vector.extract_strided_slice %204 {offsets = [0, 0], sizes = [8, 32], strides = [1, 1]} : vector<8x128xf32> to vector<8x32xf32>
    %207 = vector.extract_strided_slice %204 {offsets = [0, 32], sizes = [8, 32], strides = [1, 1]} : vector<8x128xf32> to vector<8x32xf32>
    %208 = vector.extract_strided_slice %205 {offsets = [0, 64], sizes = [8, 32], strides = [1, 1]} : vector<8x128xf32> to vector<8x32xf32>
    %209 = vector.extract_strided_slice %204 {offsets = [0, 96], sizes = [8, 32], strides = [1, 1]} : vector<8x128xf32> to vector<8x32xf32>
    %210 = tpu.concatenate %191, %193 in 0 : vector<4x32xf32>, vector<4x32xf32> -> vector<8x32xf32>
    %211 = arith.mulf %207, %210 : vector<8x32xf32>
    %212 = arith.mulf %206, %208 : vector<8x32xf32>
    %213 = arith.addf %211, %212 : vector<8x32xf32>
    %214 = math.tanh %213 : vector<8x32xf32>
    %215 = arith.mulf %209, %214 : vector<8x32xf32>
    %216 = vector.extract_strided_slice %215 {offsets = [0, 0], sizes = [4, 32], strides = [1, 1]} : vector<8x32xf32> to vector<4x32xf32>
    %217 = vector.extract_strided_slice %213 {offsets = [0, 0], sizes = [4, 32], strides = [1, 1]} : vector<8x32xf32> to vector<4x32xf32>
    %218 = vector.extract_strided_slice %215 {offsets = [4, 0], sizes = [4, 32], strides = [1, 1]} : vector<8x32xf32> to vector<4x32xf32>
    %219 = vector.extract_strided_slice %213 {offsets = [4, 0], sizes = [4, 32], strides = [1, 1]} : vector<8x32xf32> to vector<4x32xf32>
    %220 = tpu.concatenate %216, %13, %13, %13 in 1 : vector<4x32xf32>, vector<4x32xf32>, vector<4x32xf32>, vector<4x32xf32> -> vector<4x128xf32>
    %221 = tpu.concatenate %13, %216, %218, %13 in 1 : vector<4x32xf32>, vector<4x32xf32>, vector<4x32xf32>, vector<4x32xf32> -> vector<4x128xf32>
    %222 = tpu.concatenate %220, %221 in 0 : vector<4x128xf32>, vector<4x128xf32> -> vector<8x128xf32>
    %cst_29 = arith.constant dense<0.000000e+00> : vector<8x128xf32>
    %223 = tpu.matmul %222, %1, %cst_29 {dimension_numbers = #tpu.dot_dimension_numbers<[1], [0], [0], [1], [0, 0, 1, 1], [], []>} : vector<8x128xf32>, vector<128x128xf32>, vector<8x128xf32> -> vector<8x128xf32>
    %224 = arith.addf %2, %223 : vector<8x128xf32>
    %225 = arith.negf %224 : vector<8x128xf32>
    %226 = math.exp %225 : vector<8x128xf32>
    %cst_30 = arith.constant 1.000000e+00 : f32
    %227 = vector.broadcast %cst_30 : f32 to vector<8x128xf32>
    %228 = arith.addf %227, %226 : vector<8x128xf32>
    %229 = arith.divf %227, %228 : vector<8x128xf32>
    %230 = math.tanh %224 : vector<8x128xf32>
    %231 = vector.extract_strided_slice %229 {offsets = [0, 0], sizes = [8, 32], strides = [1, 1]} : vector<8x128xf32> to vector<8x32xf32>
    %232 = vector.extract_strided_slice %229 {offsets = [0, 32], sizes = [8, 32], strides = [1, 1]} : vector<8x128xf32> to vector<8x32xf32>
    %233 = vector.extract_strided_slice %230 {offsets = [0, 64], sizes = [8, 32], strides = [1, 1]} : vector<8x128xf32> to vector<8x32xf32>
    %234 = vector.extract_strided_slice %229 {offsets = [0, 96], sizes = [8, 32], strides = [1, 1]} : vector<8x128xf32> to vector<8x32xf32>
    %235 = tpu.concatenate %217, %219 in 0 : vector<4x32xf32>, vector<4x32xf32> -> vector<8x32xf32>
    %236 = arith.mulf %232, %235 : vector<8x32xf32>
    %237 = arith.mulf %231, %233 : vector<8x32xf32>
    %238 = arith.addf %236, %237 : vector<8x32xf32>
    %239 = math.tanh %238 : vector<8x32xf32>
    %240 = arith.mulf %234, %239 : vector<8x32xf32>
    %241 = vector.extract_strided_slice %240 {offsets = [4, 0], sizes = [4, 32], strides = [1, 1]} : vector<8x32xf32> to vector<4x32xf32>
    %242 = vector.extract_strided_slice %238 {offsets = [4, 0], sizes = [4, 32], strides = [1, 1]} : vector<8x32xf32> to vector<4x32xf32>
    %243 = tpu.concatenate %62, %88, %114, %140, %166, %192, %218, %241 in 0 : vector<4x32xf32>, vector<4x32xf32>, vector<4x32xf32>, vector<4x32xf32>, vector<4x32xf32>, vector<4x32xf32>, vector<4x32xf32>, vector<4x32xf32> -> vector<32x32xf32>
    %cst_31 = arith.constant dense<0.000000e+00> : vector<32x128xf32>
    %244 = tpu.matmul %243, %3, %cst_31 {dimension_numbers = #tpu.dot_dimension_numbers<[1], [0], [0], [1], [0, 0, 1, 1], [], []>} : vector<32x32xf32>, vector<32x128xf32>, vector<32x128xf32> -> vector<32x128xf32>
    %245 = vector.broadcast %4 : vector<1x128xf32> to vector<32x128xf32>
    %246 = arith.addf %244, %245 : vector<32x128xf32>
    %c0_32 = arith.constant 0 : index
    %c0_33 = arith.constant 0 : index
    %247 = vector.load %arg3[%c0_32, %c0_33] : memref<32x128xf32, #tpu.memory_space<vmem>>, vector<32x128xf32>
    tpu.vector_store %arg3[%c0_32, %c0_33], %246 {strides = array<i32>} : memref<32x128xf32, #tpu.memory_space<vmem>>, vector<32x128xf32>,
    %248 = tpu.concatenate %216, %241, %217, %242 in 0 : vector<4x32xf32>, vector<4x32xf32>, vector<4x32xf32>, vector<4x32xf32> -> vector<16x32xf32>
    %c0_34 = arith.constant 0 : index
    %c0_35 = arith.constant 0 : index
    %249 = vector.load %arg4[%c0_34, %c0_35] : memref<16x32xf32, #tpu.memory_space<vmem>>, vector<16x32xf32>
    tpu.vector_store %arg4[%c0_34, %c0_35], %248 {strides = array<i32>} : memref<16x32xf32, #tpu.memory_space<vmem>>, vector<16x32xf32>,
    return
  }
}

</mosaic_0001>

<llo_original>
// kernel: tpu_custom_call.1
$region0: #{tpu_custom_call.1}
  #allocation0 [shape = 'u32[]', space=smem, size = 0x4, offset = 0x4, fixed_abs, tag = 'smem constant byte address 0x4 - core index']
  #allocation1 [shape = 'u32[72,128]{1,0:T(1,128)}', space=vmem, size = 0x9000, scoped, tag = 'internal scratch']
  %s0 = inlined_call_operand.hbm [shape: f32[64,128], index: 0, kind: input, shape index: {}]
  %s1 = inlined_call_operand.hbm [shape: f32[16,32], index: 1, kind: input, shape index: {}]
  %s2 = inlined_call_operand.hbm [shape: f32[304,128], index: 2, kind: input, shape index: {}]
  %s3 = inlined_call_operand.hbm [shape: f32[32,128], index: 3, kind: output, shape index: {0}]
  %s4 = inlined_call_operand.hbm [shape: f32[16,32], index: 4, kind: output, shape index: {1}]
  %5 = xla_tuple %s3, %s4
  %s6 = sld [smem:[#allocation0]]
  $region42: #{tpu_custom_call.1} parent=0
    _
  %s8 = ssub.s32 1, %s6
  %s9 = scalar_select 0, %s8, %s6
  $region1: #{tpu_custom_call.1} parent=0
    #allocation2 [shape = 'u8[32768]{0}', space=vmem, size = 0x8000, scoped, tag = 'input window, operand 0, single buffered']
    #allocation3 [shape = 's32[1]{0}', space=sflag, size = 0x4, scoped, tag = 'scoped memory for tpu_custom_call.1']
    #allocation4 [shape = 's32[1]{0}', space=sflag, size = 0x4, scoped, tag = 'scoped memory for tpu_custom_call.1']
    #allocation5 [shape = 'u8[8192]{0}', space=vmem, size = 0x2000, scoped, tag = 'input window, operand 1, single buffered']
    #allocation6 [shape = 's32[1]{0}', space=sflag, size = 0x4, scoped, tag = 'scoped memory for tpu_custom_call.1']
    #allocation7 [shape = 'u8[155648]{0}', space=vmem, size = 0x26000, scoped, tag = 'input window, operand 2, single buffered']
    #allocation8 [shape = 'u8[16384]{0}', space=vmem, size = 0x4000, scoped, tag = 'output window, operand 0, single buffered']
    #allocation9 [shape = 'u8[8192]{0}', space=vmem, size = 0x2000, scoped, tag = 'output window, operand 1, single buffered']
    #allocation10 [shape = 's32[1]{0}', space=sflag, size = 0x4, scoped, tag = 'scoped memory for tpu_custom_call.1']
    %10 = vsyncpa [#allocation3], 0
    %11 = vsyncpa [#allocation6], 0
    %12 = vsyncpa [#allocation4], 0
    %13 = vsyncpa [#allocation10], 0
    // Predicated region
    $region2: #{tpu_custom_call.1} parent=1 // pred_check
      _
    $region3: #{tpu_custom_call.1} parent=1 // pred_check_branch
      %15 = sbr.rel (0) target = $region5
    $region4: #{tpu_custom_call.1} parent=1 // pred_region
      %17 = vsyncadd [#allocation3], 0
      %s18 = sshll.u32 %s0, 4
      %s19 = int_to_ptr.hbm [resolvable:$true] %s18
      %s20 = sshll.u32 [#allocation2], 4
      %s21 = int_to_ptr.vmem [resolvable:$true] %s20
      %26 = dma.hbm_to_vmem [thread:$0]  %s19, 1024, %s21, [#allocation3], 128, 128, 8
    $region5: #{tpu_custom_call.1} parent=1 // pred_fallthru
      _
    // Predicated region
    $region6: #{tpu_custom_call.1} parent=1 // pred_check
      _
    $region7: #{tpu_custom_call.1} parent=1 // pred_check_branch
      %28 = sbr.rel (0) target = $region9
    $region8: #{tpu_custom_call.1} parent=1 // pred_region
      %30 = vsyncadd [#allocation6], 0
      %s31 = sshll.u32 %s1, 4
      %s32 = int_to_ptr.hbm [resolvable:$true] %s31
      %s33 = sshll.u32 [#allocation5], 4
      %s34 = int_to_ptr.vmem [resolvable:$true] %s33
      %39 = dma.hbm_to_vmem [thread:$0]  %s32, 256, %s34, [#allocation6], 128, 128, 8
    $region9: #{tpu_custom_call.1} parent=1 // pred_fallthru
      _
    // Predicated region
    $region10: #{tpu_custom_call.1} parent=1 // pred_check
      _
    $region11: #{tpu_custom_call.1} parent=1 // pred_check_branch
      %41 = sbr.rel (0) target = $region13
    $region12: #{tpu_custom_call.1} parent=1 // pred_region
      %43 = vsyncadd [#allocation6], 0
      %s44 = sshll.u32 %s2, 4
      %s45 = int_to_ptr.hbm [resolvable:$true] %s44
      %s46 = sshll.u32 [#allocation7], 4
      %s47 = int_to_ptr.vmem [resolvable:$true] %s46
      %52 = dma.hbm_to_vmem [thread:$0]  %s45, 4864, %s47, [#allocation6], 128, 128, 8
    $region13: #{tpu_custom_call.1} parent=1 // pred_fallthru
      _
    // Predicated region
    $region14: #{tpu_custom_call.1} parent=1 // pred_check
      _
    $region15: #{tpu_custom_call.1} parent=1 // pred_check_branch
      %54 = sbr.rel (0) target = $region17
    $region16: #{tpu_custom_call.1} parent=1 // pred_region
      %56 = dma.done [#allocation3], 1024
    $region17: #{tpu_custom_call.1} parent=1 // pred_fallthru
      _
    // Predicated region
    $region18: #{tpu_custom_call.1} parent=1 // pred_check
      _
    $region19: #{tpu_custom_call.1} parent=1 // pred_check_branch
      %58 = sbr.rel (0) target = $region21
    $region20: #{tpu_custom_call.1} parent=1 // pred_region
      %60 = dma.done [#allocation6], 256
    $region21: #{tpu_custom_call.1} parent=1 // pred_fallthru
      _
    // Predicated region
    $region22: #{tpu_custom_call.1} parent=1 // pred_check
      _
    $region23: #{tpu_custom_call.1} parent=1 // pred_check_branch
      %62 = sbr.rel (0) target = $region25
    $region24: #{tpu_custom_call.1} parent=1 // pred_region
      %64 = dma.done [#allocation6], 4864
    $region25: #{tpu_custom_call.1} parent=1 // pred_fallthru
      _
    %v65 = vld [vmem:[#allocation7] sm:$0xff]
    %v66 = vld [vmem:[#allocation7 + $0x8] sm:$0xff]
    %v67 = vld [vmem:[#allocation7 + $0x10] sm:$0xff]
    %v68 = vld [vmem:[#allocation7 + $0x18] sm:$0xff]
    %v69 = vld [vmem:[#allocation7 + $0x20] sm:$0xff]
    %v70 = vld [vmem:[#allocation7 + $0x28] sm:$0xff]
    %v71 = vld [vmem:[#allocation7 + $0x30] sm:$0xff]
    %v72 = vld [vmem:[#allocation7 + $0x38] sm:$0xff]
    %v73 = vld [vmem:[#allocation7 + $0x40] sm:$0xff]
    %v74 = vld [vmem:[#allocation7 + $0x48] sm:$0xff]
    %v75 = vld [vmem:[#allocation7 + $0x50] sm:$0xff]
    %v76 = vld [vmem:[#allocation7 + $0x58] sm:$0xff]
    %v77 = vld [vmem:[#allocation7 + $0x60] sm:$0xff]
    %v78 = vld [vmem:[#allocation7 + $0x68] sm:$0xff]
    %v79 = vld [vmem:[#allocation7 + $0x70] sm:$0xff]
    %v80 = vld [vmem:[#allocation7 + $0x78] sm:$0xff]
    %v81 = vld [vmem:[#allocation7 + $0x80] sm:$0xff]
    %v82 = vld [vmem:[#allocation7 + $0x88] sm:$0xff]
    %v83 = vld [vmem:[#allocation7 + $0x90] sm:$0xff]
    %v84 = vld [vmem:[#allocation7 + $0x98] sm:$0xff]
    %v85 = vld [vmem:[#allocation7 + $0xa0] sm:$0xff]
    %v86 = vld [vmem:[#allocation7 + $0xa8] sm:$0xff]
    %v87 = vld [vmem:[#allocation7 + $0xb0] sm:$0xff]
    %v88 = vld [vmem:[#allocation7 + $0xb8] sm:$0xff]
    %v89 = vld [vmem:[#allocation7 + $0xc0] sm:$0xff]
    %v90 = vld [vmem:[#allocation7 + $0xc8] sm:$0xff]
    %v91 = vld [vmem:[#allocation7 + $0xd0] sm:$0xff]
    %v92 = vld [vmem:[#allocation7 + $0xd8] sm:$0xff]
    %v93 = vld [vmem:[#allocation7 + $0xe0] sm:$0xff]
    %v94 = vld [vmem:[#allocation7 + $0xe8] sm:$0xff]
    %v95 = vld [vmem:[#allocation7 + $0xf0] sm:$0xff]
    %v96 = vld [vmem:[#allocation7 + $0xf8] sm:$0xff]
    %v97 = vld [vmem:[#allocation7 + $0x100] sm:$0xff]
    %v98 = vld [vmem:[#allocation7 + $0x108] sm:$0xff]
    %v99 = vld [vmem:[#allocation7 + $0x110] sm:$0xff]
    %v100 = vld [vmem:[#allocation7 + $0x118] sm:$0xff]
    %v101 = vld [vmem:[#allocation7 + $0x120] sm:$0xff]
    %v102 = vld [vmem:[#allocation7 + $0x128] sm:$0x1]
    %v103 = vld [vmem:[#allocation2] sm:$0xff]
    %v104 = vld [vmem:[#allocation2 + $0x8] sm:$0xff]
    %v105 = vld [vmem:[#allocation2 + $0x10] sm:$0xff]
    %v106 = vld [vmem:[#allocation2 + $0x18] sm:$0xff]
    %v107 = vld [vmem:[#allocation2 + $0x20] sm:$0xff]
    %v108 = vld [vmem:[#allocation2 + $0x28] sm:$0xff]
    %v109 = vld [vmem:[#allocation2 + $0x30] sm:$0xff]
    %v110 = vld [vmem:[#allocation2 + $0x38] sm:$0xff]
    %111 = vmatpush.msra.mxu0 %v80
    %112 = vmatpush.msra.mxu0 %v79
    %113 = vmatpush.msra.mxu0 %v78
    %114 = vmatpush.msra.mxu0 %v77
    %115 = vmatpush.msra.mxu0 %v76
    %116 = vmatpush.msra.mxu0 %v75
    %117 = vmatpush.msra.mxu0 %v74
    %118 = vmatpush.msra.mxu0 %v73
    %119 = vmatpush.msra.mxu0 %v72
    %120 = vmatpush.msra.mxu0 %v71
    %121 = vmatpush.msra.mxu0 %v70
    %122 = vmatpush.msra.mxu0 %v69
    %123 = vmatpush.msra.mxu0 %v68
    %124 = vmatpush.msra.mxu0 %v67
    %125 = vmatpush.msra.mxu0 %v66
    %126 = vmatpush.msra.mxu0 %v65
    %127 = vmatmul.f32.gmra.mxu0 %v103
    %v128 = vpop.f32.mrf.mxu0
    %v129 = vadd.f32 %v97, %v128
    %130 = vmatmul.f32.gmra.mxu0 %v104
    %v131 = vpop.f32.mrf.mxu0
    %v132 = vadd.f32 %v97, %v131
    %133 = vmatmul.f32.gmra.mxu0 %v105
    %v134 = vpop.f32.mrf.mxu0
    %v135 = vadd.f32 %v97, %v134
    %136 = vmatmul.f32.gmra.mxu0 %v106
    %v137 = vpop.f32.mrf.mxu0
    %v138 = vadd.f32 %v97, %v137
    %139 = vmatmul.f32.gmra.mxu0 %v107
    %v140 = vpop.f32.mrf.mxu0
    %v141 = vadd.f32 %v97, %v140
    %142 = vmatmul.f32.gmra.mxu0 %v108
    %v143 = vpop.f32.mrf.mxu0
    %v144 = vadd.f32 %v97, %v143
    %145 = vmatmul.f32.gmra.mxu0 %v109
    %v146 = vpop.f32.mrf.mxu0
    %v147 = vadd.f32 %v97, %v146
    %148 = vmatmul.f32.gmra.mxu0 %v110
    %v149 = vpop.f32.mrf.mxu0
    %v150 = vadd.f32 %v97, %v149
    %151 = vdwg.mxu0
    %v152 = vld [vmem:[#allocation5] sm:$0xf]
    %v153 = vld [vmem:[#allocation5 + $0x4] sm:$0xf]
    %v154 = vld [vmem:[#allocation5 + $0x8] sm:$0xf]
    %v155 = vld [vmem:[#allocation5 + $0xc] sm:$0xf]
    %vm156 = vcmask 261120
    %v157 = vsel %vm156, %v152, 0.0
    %vm158 = vcmask 523264
    %v159 = vsel %vm158, %v157, 0.0
    %vm160 = vcmask 785408
    %v161 = vsel %vm160, %v159, 0.0
    %163 = vrot.lane.b32.xlu0 %v152, 32
    %v164 = vpop.permute.xlu0 %163
    %167 = vrot.lane.b32.xlu0 %v153, 64
    %v168 = vpop.permute.xlu0 %167
    %v170 = vsel %vm156, 0.0, %v164
    %v171 = vsel %vm158, %v170, %v168
    %v172 = vsel %vm160, %v171, 0.0
    %v174 = vrot.slane %v172, 4
    %vm176 = vcmask 1043456
    %v177 = vsel %vm176, %v161, %v174
    %178 = vmatpush.msra.mxu0 %v96
    %179 = vmatpush.msra.mxu0 %v95
    %180 = vmatpush.msra.mxu0 %v94
    %181 = vmatpush.msra.mxu0 %v93
    %182 = vmatpush.msra.mxu0 %v92
    %183 = vmatpush.msra.mxu0 %v91
    %184 = vmatpush.msra.mxu0 %v90
    %185 = vmatpush.msra.mxu0 %v89
    %186 = vmatpush.msra.mxu0 %v88
    %187 = vmatpush.msra.mxu0 %v87
    %188 = vmatpush.msra.mxu0 %v86
    %189 = vmatpush.msra.mxu0 %v85
    %190 = vmatpush.msra.mxu0 %v84
    %191 = vmatpush.msra.mxu0 %v83
    %192 = vmatpush.msra.mxu0 %v82
    %193 = vmatpush.msra.mxu0 %v81
    %194 = vmatmul.f32.gmra.mxu0 %v177
    %v195 = vpop.f32.mrf.mxu0
    %v196 = vadd.f32 0.0, %v195
    %197 = vdwg.mxu0
    %v198 = vadd.f32 %v129, %v196
    %v199 = vxor.u32 %v198, 2147483648
    %v200 = vmul.f32 %v199, 1.442695
    %v201 = vpow.pop %v200
    %v202 = vadd.f32 %v201, 1.0
    %v203 = vrcp.pop %v202
    %v204 = vmul.f32 %v202, %v203
    %v205 = vsub.f32 1.0, %v204
    %v206 = vmul.f32 %v203, %v205
    %v207 = vadd.f32 %v203, %v206
    %vm208 = vweird.f32 %v202
    %vm209 = vweird.f32 %v203
    %vm210 = vmor %vm208, %vm209
    %v211 = vsel %vm210, %v203, %v207
    %v212 = vand.u32 2147483647, %v202
    %vm213 = vcmp.eq.f32.partialorder %v212, 8.507059e+37
    %v214 = vand.u32 %v202, 2147483648
    %v215 = vor.u32 1.1754944e-38, %v214
    %v216 = vsel %vm213, %v215, %v211
    %v217 = vmul.f32 1.0, %v216
    %v218 = vtanh.pop %v198
    %v220 = vrot.slane %v155, 4
    %v222 = vsel %vm176, %v154, %v220
    %224 = vrot.lane.b32.xlu0 %v222, 32
    %v225 = vpop.permute.xlu0 %224
    %v227 = vmul.f32 %v217, %v225
    %229 = vrot.lane.b32.xlu0 %v218, 64
    %v230 = vpop.permute.xlu0 %229
    %v232 = vmul.f32 %v217, %v230
    %234 = vrot.lane.b32.xlu0 %v232, 32
    %v235 = vpop.permute.xlu0 %234
    %v237 = vadd.f32 %v227, %v235
    %v238 = vtanh.pop %v237
    %240 = vrot.lane.b32.xlu0 %v238, 64
    %v241 = vpop.permute.xlu0 %240
    %v243 = vmul.f32 %v217, %v241
    %245 = vrot.lane.b32.xlu0 %v243, 32
    %v246 = vpop.permute.xlu0 %245
    %v248 = vsel %vm156, %v246, 0.0
    %v249 = vsel %vm158, %v248, 0.0
    %v250 = vsel %vm160, %v249, 0.0
    %251 = vrot.lane.b32.xlu0 %v243, 64
    %v252 = vpop.permute.xlu0 %251
    %v254 = vsel %vm156, 0.0, %v252
    %v255 = vsel %vm158, %v254, %v168
    %v256 = vsel %vm160, %v255, 0.0
    %v258 = vrot.slane %v256, 4
    %v260 = vsel %vm176, %v250, %v258
    %261 = vmatpush.msra.mxu0 %v96
    %262 = vmatpush.msra.mxu0 %v95
    %263 = vmatpush.msra.mxu0 %v94
    %264 = vmatpush.msra.mxu0 %v93
    %265 = vmatpush.msra.mxu0 %v92
    %266 = vmatpush.msra.mxu0 %v91
    %267 = vmatpush.msra.mxu0 %v90
    %268 = vmatpush.msra.mxu0 %v89
    %269 = vmatpush.msra.mxu0 %v88
    %270 = vmatpush.msra.mxu0 %v87
    %271 = vmatpush.msra.mxu0 %v86
    %272 = vmatpush.msra.mxu0 %v85
    %273 = vmatpush.msra.mxu0 %v84
    %274 = vmatpush.msra.mxu0 %v83
    %275 = vmatpush.msra.mxu0 %v82
    %276 = vmatpush.msra.mxu0 %v81
    %277 = vmatmul.f32.gmra.mxu0 %v260
    %v278 = vpop.f32.mrf.mxu0
    %v279 = vadd.f32 0.0, %v278
    %280 = vdwg.mxu0
    %v281 = vadd.f32 %v132, %v279
    %v282 = vxor.u32 %v281, 2147483648
    %v283 = vmul.f32 %v282, 1.442695
    %v284 = vpow.pop %v283
    %v285 = vadd.f32 %v284, 1.0
    %v286 = vrcp.pop %v285
    %v287 = vmul.f32 %v285, %v286
    %v288 = vsub.f32 1.0, %v287
    %v289 = vmul.f32 %v286, %v288
    %v290 = vadd.f32 %v286, %v289
    %vm291 = vweird.f32 %v285
    %vm292 = vweird.f32 %v286
    %vm293 = vmor %vm291, %vm292
    %v294 = vsel %vm293, %v286, %v290
    %v295 = vand.u32 2147483647, %v285
    %vm296 = vcmp.eq.f32.partialorder %v295, 8.507059e+37
    %v297 = vand.u32 %v285, 2147483648
    %v298 = vor.u32 1.1754944e-38, %v297
    %v299 = vsel %vm296, %v298, %v294
    %v300 = vmul.f32 1.0, %v299
    %v301 = vtanh.pop %v281
    %302 = vrot.lane.b32.xlu0 %v220, 32
    %v303 = vpop.permute.xlu0 %302
    %v305 = vsel %vm176, %v237, %v303
    %v306 = vmul.f32 %v300, %v305
    %308 = vrot.lane.b32.xlu0 %v301, 64
    %v309 = vpop.permute.xlu0 %308
    %v311 = vmul.f32 %v300, %v309
    %313 = vrot.lane.b32.xlu0 %v311, 32
    %v314 = vpop.permute.xlu0 %313
    %v316 = vadd.f32 %v306, %v314
    %v317 = vtanh.pop %v316
    %319 = vrot.lane.b32.xlu0 %v317, 64
    %v320 = vpop.permute.xlu0 %319
    %v322 = vmul.f32 %v300, %v320
    %324 = vrot.lane.b32.xlu0 %v322, 32
    %v325 = vpop.permute.xlu0 %324
    %v327 = vsel %vm156, %v325, 0.0
    %v328 = vsel %vm158, %v327, 0.0
    %v329 = vsel %vm160, %v328, 0.0
    %330 = vrot.lane.b32.xlu0 %v322, 64
    %v331 = vpop.permute.xlu0 %330
    %v333 = vrot.slane %v322, 4
    %334 = vrot.lane.b32.xlu0 %v333, 96
    %v335 = vpop.permute.xlu0 %334
    %v337 = vsel %vm156, 0.0, %v331
    %v338 = vsel %vm158, %v337, %v335
    %v339 = vsel %vm160, %v338, 0.0
    %v341 = vrot.slane %v339, 4
    %v343 = vsel %vm176, %v329, %v341
    %344 = vmatpush.msra.mxu0 %v96
    %345 = vmatpush.msra.mxu0 %v95
    %346 = vmatpush.msra.mxu0 %v94
    %347 = vmatpush.msra.mxu0 %v93
    %348 = vmatpush.msra.mxu0 %v92
    %349 = vmatpush.msra.mxu0 %v91
    %350 = vmatpush.msra.mxu0 %v90
    %351 = vmatpush.msra.mxu0 %v89
    %352 = vmatpush.msra.mxu0 %v88
    %353 = vmatpush.msra.mxu0 %v87
    %354 = vmatpush.msra.mxu0 %v86
    %355 = vmatpush.msra.mxu0 %v85
    %356 = vmatpush.msra.mxu0 %v84
    %357 = vmatpush.msra.mxu0 %v83
    %358 = vmatpush.msra.mxu0 %v82
    %359 = vmatpush.msra.mxu0 %v81
    %360 = vmatmul.f32.gmra.mxu0 %v343
    %v361 = vpop.f32.mrf.mxu0
    %v362 = vadd.f32 0.0, %v361
    %363 = vdwg.mxu0
    %v364 = vadd.f32 %v135, %v362
    %v365 = vxor.u32 %v364, 2147483648
    %v366 = vmul.f32 %v365, 1.442695
    %v367 = vpow.pop %v366
    %v368 = vadd.f32 %v367, 1.0
    %v369 = vrcp.pop %v368
    %v370 = vmul.f32 %v368, %v369
    %v371 = vsub.f32 1.0, %v370
    %v372 = vmul.f32 %v369, %v371
    %v373 = vadd.f32 %v369, %v372
    %vm374 = vweird.f32 %v368
    %vm375 = vweird.f32 %v369
    %vm376 = vmor %vm374, %vm375
    %v377 = vsel %vm376, %v369, %v373
    %v378 = vand.u32 2147483647, %v368
    %vm379 = vcmp.eq.f32.partialorder %v378, 8.507059e+37
    %v380 = vand.u32 %v368, 2147483648
    %v381 = vor.u32 1.1754944e-38, %v380
    %v382 = vsel %vm379, %v381, %v377
    %v383 = vmul.f32 1.0, %v382
    %v384 = vtanh.pop %v364
    %v385 = vmul.f32 %v383, %v316
    %387 = vrot.lane.b32.xlu0 %v384, 64
    %v388 = vpop.permute.xlu0 %387
    %v390 = vmul.f32 %v383, %v388
    %392 = vrot.lane.b32.xlu0 %v390, 32
    %v393 = vpop.permute.xlu0 %392
    %v395 = vadd.f32 %v385, %v393
    %v396 = vtanh.pop %v395
    %398 = vrot.lane.b32.xlu0 %v396, 64
    %v399 = vpop.permute.xlu0 %398
    %v401 = vmul.f32 %v383, %v399
    %403 = vrot.lane.b32.xlu0 %v401, 32
    %v404 = vpop.permute.xlu0 %403
    %v406 = vsel %vm156, %v404, 0.0
    %v407 = vsel %vm158, %v406, 0.0
    %v408 = vsel %vm160, %v407, 0.0
    %409 = vrot.lane.b32.xlu0 %v401, 64
    %v410 = vpop.permute.xlu0 %409
    %v412 = vrot.slane %v401, 4
    %413 = vrot.lane.b32.xlu0 %v412, 96
    %v414 = vpop.permute.xlu0 %413
    %v416 = vsel %vm156, 0.0, %v410
    %v417 = vsel %vm158, %v416, %v414
    %v418 = vsel %vm160, %v417, 0.0
    %v420 = vrot.slane %v418, 4
    %v422 = vsel %vm176, %v408, %v420
    %423 = vmatpush.msra.mxu0 %v96
    %424 = vmatpush.msra.mxu0 %v95
    %425 = vmatpush.msra.mxu0 %v94
    %426 = vmatpush.msra.mxu0 %v93
    %427 = vmatpush.msra.mxu0 %v92
    %428 = vmatpush.msra.mxu0 %v91
    %429 = vmatpush.msra.mxu0 %v90
    %430 = vmatpush.msra.mxu0 %v89
    %431 = vmatpush.msra.mxu0 %v88
    %432 = vmatpush.msra.mxu0 %v87
    %433 = vmatpush.msra.mxu0 %v86
    %434 = vmatpush.msra.mxu0 %v85
    %435 = vmatpush.msra.mxu0 %v84
    %436 = vmatpush.msra.mxu0 %v83
    %437 = vmatpush.msra.mxu0 %v82
    %438 = vmatpush.msra.mxu0 %v81
    %439 = vmatmul.f32.gmra.mxu0 %v422
    %v440 = vpop.f32.mrf.mxu0
    %v441 = vadd.f32 0.0, %v440
    %442 = vdwg.mxu0
    %v443 = vadd.f32 %v138, %v441
    %v444 = vxor.u32 %v443, 2147483648
    %v445 = vmul.f32 %v444, 1.442695
    %v446 = vpow.pop %v445
    %v447 = vadd.f32 %v446, 1.0
    %v448 = vrcp.pop %v447
    %v449 = vmul.f32 %v447, %v448
    %v450 = vsub.f32 1.0, %v449
    %v451 = vmul.f32 %v448, %v450
    %v452 = vadd.f32 %v448, %v451
    %vm453 = vweird.f32 %v447
    %vm454 = vweird.f32 %v448
    %vm455 = vmor %vm453, %vm454
    %v456 = vsel %vm455, %v448, %v452
    %v457 = vand.u32 2147483647, %v447
    %vm458 = vcmp.eq.f32.partialorder %v457, 8.507059e+37
    %v459 = vand.u32 %v447, 2147483648
    %v460 = vor.u32 1.1754944e-38, %v459
    %v461 = vsel %vm458, %v460, %v456
    %v462 = vmul.f32 1.0, %v461
    %v463 = vtanh.pop %v443
    %v464 = vmul.f32 %v462, %v395
    %466 = vrot.lane.b32.xlu0 %v463, 64
    %v467 = vpop.permute.xlu0 %466
    %v469 = vmul.f32 %v462, %v467
    %471 = vrot.lane.b32.xlu0 %v469, 32
    %v472 = vpop.permute.xlu0 %471
    %v474 = vadd.f32 %v464, %v472
    %v475 = vtanh.pop %v474
    %477 = vrot.lane.b32.xlu0 %v475, 64
    %v478 = vpop.permute.xlu0 %477
    %v480 = vmul.f32 %v462, %v478
    %482 = vrot.lane.b32.xlu0 %v480, 32
    %v483 = vpop.permute.xlu0 %482
    %v485 = vsel %vm156, %v483, 0.0
    %v486 = vsel %vm158, %v485, 0.0
    %v487 = vsel %vm160, %v486, 0.0
    %488 = vrot.lane.b32.xlu0 %v480, 64
    %v489 = vpop.permute.xlu0 %488
    %v491 = vrot.slane %v480, 4
    %492 = vrot.lane.b32.xlu0 %v491, 96
    %v493 = vpop.permute.xlu0 %492
    %v495 = vsel %vm156, 0.0, %v489
    %v496 = vsel %vm158, %v495, %v493
    %v497 = vsel %vm160, %v496, 0.0
    %v499 = vrot.slane %v497, 4
    %v501 = vsel %vm176, %v487, %v499
    %502 = vmatpush.msra.mxu0 %v96
    %503 = vmatpush.msra.mxu0 %v95
    %504 = vmatpush.msra.mxu0 %v94
    %505 = vmatpush.msra.mxu0 %v93
    %506 = vmatpush.msra.mxu0 %v92
    %507 = vmatpush.msra.mxu0 %v91
    %508 = vmatpush.msra.mxu0 %v90
    %509 = vmatpush.msra.mxu0 %v89
    %510 = vmatpush.msra.mxu0 %v88
    %511 = vmatpush.msra.mxu0 %v87
    %512 = vmatpush.msra.mxu0 %v86
    %513 = vmatpush.msra.mxu0 %v85
    %514 = vmatpush.msra.mxu0 %v84
    %515 = vmatpush.msra.mxu0 %v83
    %516 = vmatpush.msra.mxu0 %v82
    %517 = vmatpush.msra.mxu0 %v81
    %518 = vmatmul.f32.gmra.mxu0 %v501
    %v519 = vpop.f32.mrf.mxu0
    %v520 = vadd.f32 0.0, %v519
    %521 = vdwg.mxu0
    %v522 = vadd.f32 %v141, %v520
    %v523 = vxor.u32 %v522, 2147483648
    %v524 = vmul.f32 %v523, 1.442695
    %v525 = vpow.pop %v524
    %v526 = vadd.f32 %v525, 1.0
    %v527 = vrcp.pop %v526
    %v528 = vmul.f32 %v526, %v527
    %v529 = vsub.f32 1.0, %v528
    %v530 = vmul.f32 %v527, %v529
    %v531 = vadd.f32 %v527, %v530
    %vm532 = vweird.f32 %v526
    %vm533 = vweird.f32 %v527
    %vm534 = vmor %vm532, %vm533
    %v535 = vsel %vm534, %v527, %v531
    %v536 = vand.u32 2147483647, %v526
    %vm537 = vcmp.eq.f32.partialorder %v536, 8.507059e+37
    %v538 = vand.u32 %v526, 2147483648
    %v539 = vor.u32 1.1754944e-38, %v538
    %v540 = vsel %vm537, %v539, %v535
    %v541 = vmul.f32 1.0, %v540
    %v542 = vtanh.pop %v522
    %v543 = vmul.f32 %v541, %v474
    %545 = vrot.lane.b32.xlu0 %v542, 64
    %v546 = vpop.permute.xlu0 %545
    %v548 = vmul.f32 %v541, %v546
    %550 = vrot.lane.b32.xlu0 %v548, 32
    %v551 = vpop.permute.xlu0 %550
    %v553 = vadd.f32 %v543, %v551
    %v554 = vtanh.pop %v553
    %556 = vrot.lane.b32.xlu0 %v554, 64
    %v557 = vpop.permute.xlu0 %556
    %v559 = vmul.f32 %v541, %v557
    %561 = vrot.lane.b32.xlu0 %v559, 32
    %v562 = vpop.permute.xlu0 %561
    %v564 = vsel %vm156, %v562, 0.0
    %v565 = vsel %vm158, %v564, 0.0
    %v566 = vsel %vm160, %v565, 0.0
    %567 = vrot.lane.b32.xlu0 %v559, 64
    %v568 = vpop.permute.xlu0 %567
    %v570 = vrot.slane %v559, 4
    %571 = vrot.lane.b32.xlu0 %v570, 96
    %v572 = vpop.permute.xlu0 %571
    %v574 = vsel %vm156, 0.0, %v568
    %v575 = vsel %vm158, %v574, %v572
    %v576 = vsel %vm160, %v575, 0.0
    %v578 = vrot.slane %v576, 4
    %v580 = vsel %vm176, %v566, %v578
    %581 = vmatpush.msra.mxu0 %v96
    %582 = vmatpush.msra.mxu0 %v95
    %583 = vmatpush.msra.mxu0 %v94
    %584 = vmatpush.msra.mxu0 %v93
    %585 = vmatpush.msra.mxu0 %v92
    %586 = vmatpush.msra.mxu0 %v91
    %587 = vmatpush.msra.mxu0 %v90
    %588 = vmatpush.msra.mxu0 %v89
    %589 = vmatpush.msra.mxu0 %v88
    %590 = vmatpush.msra.mxu0 %v87
    %591 = vmatpush.msra.mxu0 %v86
    %592 = vmatpush.msra.mxu0 %v85
    %593 = vmatpush.msra.mxu0 %v84
    %594 = vmatpush.msra.mxu0 %v83
    %595 = vmatpush.msra.mxu0 %v82
    %596 = vmatpush.msra.mxu0 %v81
    %597 = vmatmul.f32.gmra.mxu0 %v580
    %v598 = vpop.f32.mrf.mxu0
    %v599 = vadd.f32 0.0, %v598
    %600 = vdwg.mxu0
    %v601 = vadd.f32 %v144, %v599
    %v602 = vxor.u32 %v601, 2147483648
    %v603 = vmul.f32 %v602, 1.442695
    %v604 = vpow.pop %v603
    %v605 = vadd.f32 %v604, 1.0
    %v606 = vrcp.pop %v605
    %v607 = vmul.f32 %v605, %v606
    %v608 = vsub.f32 1.0, %v607
    %v609 = vmul.f32 %v606, %v608
    %v610 = vadd.f32 %v606, %v609
    %vm611 = vweird.f32 %v605
    %vm612 = vweird.f32 %v606
    %vm613 = vmor %vm611, %vm612
    %v614 = vsel %vm613, %v606, %v610
    %v615 = vand.u32 2147483647, %v605
    %vm616 = vcmp.eq.f32.partialorder %v615, 8.507059e+37
    %v617 = vand.u32 %v605, 2147483648
    %v618 = vor.u32 1.1754944e-38, %v617
    %v619 = vsel %vm616, %v618, %v614
    %v620 = vmul.f32 1.0, %v619
    %v621 = vtanh.pop %v601
    %v622 = vmul.f32 %v620, %v553
    %624 = vrot.lane.b32.xlu0 %v621, 64
    %v625 = vpop.permute.xlu0 %624
    %v627 = vmul.f32 %v620, %v625
    %629 = vrot.lane.b32.xlu0 %v627, 32
    %v630 = vpop.permute.xlu0 %629
    %v632 = vadd.f32 %v622, %v630
    %v633 = vtanh.pop %v632
    %635 = vrot.lane.b32.xlu0 %v633, 64
    %v636 = vpop.permute.xlu0 %635
    %v638 = vmul.f32 %v620, %v636
    %640 = vrot.lane.b32.xlu0 %v638, 32
    %v641 = vpop.permute.xlu0 %640
    %v643 = vsel %vm156, %v641, 0.0
    %v644 = vsel %vm158, %v643, 0.0
    %v645 = vsel %vm160, %v644, 0.0
    %646 = vrot.lane.b32.xlu0 %v638, 64
    %v647 = vpop.permute.xlu0 %646
    %v649 = vrot.slane %v638, 4
    %650 = vrot.lane.b32.xlu0 %v649, 96
    %v651 = vpop.permute.xlu0 %650
    %v653 = vsel %vm156, 0.0, %v647
    %v654 = vsel %vm158, %v653, %v651
    %v655 = vsel %vm160, %v654, 0.0
    %v657 = vrot.slane %v655, 4
    %v659 = vsel %vm176, %v645, %v657
    %660 = vmatpush.msra.mxu0 %v96
    %661 = vmatpush.msra.mxu0 %v95
    %662 = vmatpush.msra.mxu0 %v94
    %663 = vmatpush.msra.mxu0 %v93
    %664 = vmatpush.msra.mxu0 %v92
    %665 = vmatpush.msra.mxu0 %v91
    %666 = vmatpush.msra.mxu0 %v90
    %667 = vmatpush.msra.mxu0 %v89
    %668 = vmatpush.msra.mxu0 %v88
    %669 = vmatpush.msra.mxu0 %v87
    %670 = vmatpush.msra.mxu0 %v86
    %671 = vmatpush.msra.mxu0 %v85
    %672 = vmatpush.msra.mxu0 %v84
    %673 = vmatpush.msra.mxu0 %v83
    %674 = vmatpush.msra.mxu0 %v82
    %675 = vmatpush.msra.mxu0 %v81
    %676 = vmatmul.f32.gmra.mxu0 %v659
    %v677 = vpop.f32.mrf.mxu0
    %v678 = vadd.f32 0.0, %v677
    %679 = vdwg.mxu0
    %v680 = vadd.f32 %v147, %v678
    %v681 = vxor.u32 %v680, 2147483648
    %v682 = vmul.f32 %v681, 1.442695
    %v683 = vpow.pop %v682
    %v684 = vadd.f32 %v683, 1.0
    %v685 = vrcp.pop %v684
    %v686 = vmul.f32 %v684, %v685
    %v687 = vsub.f32 1.0, %v686
    %v688 = vmul.f32 %v685, %v687
    %v689 = vadd.f32 %v685, %v688
    %vm690 = vweird.f32 %v684
    %vm691 = vweird.f32 %v685
    %vm692 = vmor %vm690, %vm691
    %v693 = vsel %vm692, %v685, %v689
    %v694 = vand.u32 2147483647, %v684
    %vm695 = vcmp.eq.f32.partialorder %v694, 8.507059e+37
    %v696 = vand.u32 %v684, 2147483648
    %v697 = vor.u32 1.1754944e-38, %v696
    %v698 = vsel %vm695, %v697, %v693
    %v699 = vmul.f32 1.0, %v698
    %v700 = vtanh.pop %v680
    %v701 = vmul.f32 %v699, %v632
    %703 = vrot.lane.b32.xlu0 %v700, 64
    %v704 = vpop.permute.xlu0 %703
    %v706 = vmul.f32 %v699, %v704
    %708 = vrot.lane.b32.xlu0 %v706, 32
    %v709 = vpop.permute.xlu0 %708
    %v711 = vadd.f32 %v701, %v709
    %v712 = vtanh.pop %v711
    %714 = vrot.lane.b32.xlu0 %v712, 64
    %v715 = vpop.permute.xlu0 %714
    %v717 = vmul.f32 %v699, %v715
    %719 = vrot.lane.b32.xlu0 %v717, 32
    %v720 = vpop.permute.xlu0 %719
    %v722 = vsel %vm156, %v720, 0.0
    %v723 = vsel %vm158, %v722, 0.0
    %v724 = vsel %vm160, %v723, 0.0
    %725 = vrot.lane.b32.xlu0 %v717, 64
    %v726 = vpop.permute.xlu0 %725
    %v728 = vrot.slane %v717, 4
    %729 = vrot.lane.b32.xlu0 %v728, 96
    %v730 = vpop.permute.xlu0 %729
    %v732 = vsel %vm156, 0.0, %v726
    %v733 = vsel %vm158, %v732, %v730
    %v734 = vsel %vm160, %v733, 0.0
    %v736 = vrot.slane %v734, 4
    %v738 = vsel %vm176, %v724, %v736
    %739 = vmatpush.msra.mxu0 %v96
    %740 = vmatpush.msra.mxu0 %v95
    %741 = vmatpush.msra.mxu0 %v94
    %742 = vmatpush.msra.mxu0 %v93
    %743 = vmatpush.msra.mxu0 %v92
    %744 = vmatpush.msra.mxu0 %v91
    %745 = vmatpush.msra.mxu0 %v90
    %746 = vmatpush.msra.mxu0 %v89
    %747 = vmatpush.msra.mxu0 %v88
    %748 = vmatpush.msra.mxu0 %v87
    %749 = vmatpush.msra.mxu0 %v86
    %750 = vmatpush.msra.mxu0 %v85
    %751 = vmatpush.msra.mxu0 %v84
    %752 = vmatpush.msra.mxu0 %v83
    %753 = vmatpush.msra.mxu0 %v82
    %754 = vmatpush.msra.mxu0 %v81
    %755 = vmatmul.f32.gmra.mxu0 %v738
    %v756 = vpop.f32.mrf.mxu0
    %v757 = vadd.f32 0.0, %v756
    %758 = vdwg.mxu0
    %v759 = vadd.f32 %v150, %v757
    %v760 = vxor.u32 %v759, 2147483648
    %v761 = vmul.f32 %v760, 1.442695
    %v762 = vpow.pop %v761
    %v763 = vadd.f32 %v762, 1.0
    %v764 = vrcp.pop %v763
    %v765 = vmul.f32 %v763, %v764
    %v766 = vsub.f32 1.0, %v765
    %v767 = vmul.f32 %v764, %v766
    %v768 = vadd.f32 %v764, %v767
    %vm769 = vweird.f32 %v763
    %vm770 = vweird.f32 %v764
    %vm771 = vmor %vm769, %vm770
    %v772 = vsel %vm771, %v764, %v768
    %v773 = vand.u32 2147483647, %v763
    %vm774 = vcmp.eq.f32.partialorder %v773, 8.507059e+37
    %v775 = vand.u32 %v763, 2147483648
    %v776 = vor.u32 1.1754944e-38, %v775
    %v777 = vsel %vm774, %v776, %v772
    %v778 = vmul.f32 1.0, %v777
    %v779 = vtanh.pop %v759
    %v780 = vmul.f32 %v778, %v711
    %782 = vrot.lane.b32.xlu0 %v779, 64
    %v783 = vpop.permute.xlu0 %782
    %v785 = vmul.f32 %v778, %v783
    %787 = vrot.lane.b32.xlu0 %v785, 32
    %v788 = vpop.permute.xlu0 %787
    %v790 = vadd.f32 %v780, %v788
    %v791 = vtanh.pop %v790
    %793 = vrot.lane.b32.xlu0 %v791, 64
    %v794 = vpop.permute.xlu0 %793
    %v796 = vmul.f32 %v778, %v794
    %798 = vrot.lane.b32.xlu0 %v796, 32
    %v799 = vpop.permute.xlu0 %798
    %v801 = vsel %vm156, %v799, 0.0
    %v802 = vsel %vm158, %v801, 0.0
    %v803 = vsel %vm160, %v802, 0.0
    %804 = vrot.lane.b32.xlu0 %v796, 64
    %v805 = vpop.permute.xlu0 %804
    %v807 = vrot.slane %v796, 4
    %808 = vrot.lane.b32.xlu0 %v807, 96
    %v809 = vpop.permute.xlu0 %808
    %v811 = vsel %vm156, 0.0, %v805
    %v812 = vsel %vm158, %v811, %v809
    %v813 = vsel %vm160, %v812, 0.0
    %v815 = vrot.slane %v813, 4
    %v817 = vsel %vm176, %v803, %v815
    %818 = vmatpush.msra.mxu0 %v96
    %819 = vmatpush.msra.mxu0 %v95
    %820 = vmatpush.msra.mxu0 %v94
    %821 = vmatpush.msra.mxu0 %v93
    %822 = vmatpush.msra.mxu0 %v92
    %823 = vmatpush.msra.mxu0 %v91
    %824 = vmatpush.msra.mxu0 %v90
    %825 = vmatpush.msra.mxu0 %v89
    %826 = vmatpush.msra.mxu0 %v88
    %827 = vmatpush.msra.mxu0 %v87
    %828 = vmatpush.msra.mxu0 %v86
    %829 = vmatpush.msra.mxu0 %v85
    %830 = vmatpush.msra.mxu0 %v84
    %831 = vmatpush.msra.mxu0 %v83
    %832 = vmatpush.msra.mxu0 %v82
    %833 = vmatpush.msra.mxu0 %v81
    %834 = vmatmul.f32.gmra.mxu0 %v817
    %v835 = vpop.f32.mrf.mxu0
    %v836 = vadd.f32 0.0, %v835
    %837 = vdwg.mxu0
    %v838 = vadd.f32 %v97, %v836
    %v839 = vxor.u32 %v838, 2147483648
    %v840 = vmul.f32 %v839, 1.442695
    %v841 = vpow.pop %v840
    %v842 = vadd.f32 %v841, 1.0
    %v843 = vrcp.pop %v842
    %v844 = vmul.f32 %v842, %v843
    %v845 = vsub.f32 1.0, %v844
    %v846 = vmul.f32 %v843, %v845
    %v847 = vadd.f32 %v843, %v846
    %vm848 = vweird.f32 %v842
    %vm849 = vweird.f32 %v843
    %vm850 = vmor %vm848, %vm849
    %v851 = vsel %vm850, %v843, %v847
    %v852 = vand.u32 2147483647, %v842
    %vm853 = vcmp.eq.f32.partialorder %v852, 8.507059e+37
    %v854 = vand.u32 %v842, 2147483648
    %v855 = vor.u32 1.1754944e-38, %v854
    %v856 = vsel %vm853, %v855, %v851
    %v857 = vmul.f32 1.0, %v856
    %v858 = vtanh.pop %v838
    %v859 = vmul.f32 %v857, %v790
    %861 = vrot.lane.b32.xlu0 %v858, 64
    %v862 = vpop.permute.xlu0 %861
    %v864 = vmul.f32 %v857, %v862
    %866 = vrot.lane.b32.xlu0 %v864, 32
    %v867 = vpop.permute.xlu0 %866
    %v869 = vadd.f32 %v859, %v867
    %v870 = vtanh.pop %v869
    %872 = vrot.lane.b32.xlu0 %v870, 64
    %v873 = vpop.permute.xlu0 %872
    %v875 = vmul.f32 %v857, %v873
    %v880 = vsel %vm176, %v333, %v401
    %v881 = vsel %vm176, %v491, %v559
    %v882 = vsel %vm176, %v649, %v717
    %v883 = vsel %vm176, %v807, %v875
    %v884 = vperm.slane %v102, 0
    %889 = vrot.lane.b32.xlu0 %v880, 32
    %v890 = vpop.permute.xlu0 %889
    %891 = vrot.lane.b32.xlu0 %v881, 32
    %v892 = vpop.permute.xlu0 %891
    %893 = vrot.lane.b32.xlu0 %v882, 32
    %v894 = vpop.permute.xlu0 %893
    %895 = vrot.lane.b32.xlu0 %v883, 32
    %v896 = vpop.permute.xlu0 %895
    %v897 = vsel %vm156, %v890, 0
    %v899 = vsel %vm156, %v892, 0
    %v901 = vsel %vm156, %v894, 0
    %v903 = vsel %vm156, %v896, 0
    %905 = vmatpush.msra.mxu0 0.0
    %906 = vmatpush.msra.mxu0 0.0
    %907 = vmatpush.msra.mxu0 0.0
    %908 = vmatpush.msra.mxu0 0.0
    %909 = vmatpush.msra.mxu0 0.0
    %910 = vmatpush.msra.mxu0 0.0
    %911 = vmatpush.msra.mxu0 0.0
    %912 = vmatpush.msra.mxu0 0.0
    %913 = vmatpush.msra.mxu0 0.0
    %914 = vmatpush.msra.mxu0 0.0
    %915 = vmatpush.msra.mxu0 0.0
    %916 = vmatpush.msra.mxu0 0.0
    %917 = vmatpush.msra.mxu0 %v101
    %918 = vmatpush.msra.mxu0 %v100
    %919 = vmatpush.msra.mxu0 %v99
    %920 = vmatpush.msra.mxu0 %v98
    %921 = vmatmul.f32.gmra.mxu0 %v897
    %v922 = vpop.f32.mrf.mxu0
    %v923 = vadd.f32 %v884, %v922
    %924 = vmatmul.f32.gmra.mxu0 %v899
    %v925 = vpop.f32.mrf.mxu0
    %v926 = vadd.f32 %v884, %v925
    %927 = vmatmul.f32.gmra.mxu0 %v901
    %v928 = vpop.f32.mrf.mxu0
    %v929 = vadd.f32 %v884, %v928
    %930 = vmatmul.f32.gmra.mxu0 %v903
    %v931 = vpop.f32.mrf.mxu0
    %v932 = vadd.f32 %v884, %v931
    %933 = vdwg.mxu0
    %934 = vst [vmem:[#allocation8] sm:$0xff] %v923
    %935 = vst [vmem:[#allocation8 + $0x8] sm:$0xff] %v926
    %936 = vst [vmem:[#allocation8 + $0x10] sm:$0xff] %v929
    %937 = vst [vmem:[#allocation8 + $0x18] sm:$0xff] %v932
    %939 = vrot.lane.b32.xlu0 %v790, 64
    %v940 = vpop.permute.xlu0 %939
    %943 = vrot.lane.b32.xlu0 %v869, 64
    %v944 = vpop.permute.xlu0 %943
    %v946 = vsel %vm176, %v796, %v875
    %v947 = vsel %vm176, %v940, %v944
    %950 = vrot.lane.b32.xlu0 %v946, 32
    %v951 = vpop.permute.xlu0 %950
    %952 = vrot.lane.b32.xlu0 %v947, 32
    %v953 = vpop.permute.xlu0 %952
    %956 = vst.msk [vmem:[#allocation9] sm:$0xff] %vm156, %v951
    %957 = vst.msk [vmem:[#allocation9 + $0x8] sm:$0xff] %vm156, %v953
    // Predicated region
    $region26: #{tpu_custom_call.1} parent=1 // pred_check
      _
    $region27: #{tpu_custom_call.1} parent=1 // pred_check_branch
      %959 = sbr.rel (0) target = $region29
    $region28: #{tpu_custom_call.1} parent=1 // pred_region
      %961 = vsyncadd [#allocation4], 0
      %s962 = sshll.u32 [#allocation8], 4
      %s963 = int_to_ptr.vmem [resolvable:$true] %s962
      %s964 = sshll.u32 %s3, 4
      %s965 = int_to_ptr.hbm [resolvable:$true] %s964
      %970 = dma.vmem_to_hbm [thread:$0]  %s963, 512, %s965, [#allocation4], 128, 128, 8
    $region29: #{tpu_custom_call.1} parent=1 // pred_fallthru
      _
    // Predicated region
    $region30: #{tpu_custom_call.1} parent=1 // pred_check
      _
    $region31: #{tpu_custom_call.1} parent=1 // pred_check_branch
      %972 = sbr.rel (0) target = $region33
    $region32: #{tpu_custom_call.1} parent=1 // pred_region
      %974 = vsyncadd [#allocation10], 0
      %s975 = sshll.u32 [#allocation9], 4
      %s976 = int_to_ptr.vmem [resolvable:$true] %s975
      %s977 = sshll.u32 %s4, 4
      %s978 = int_to_ptr.hbm [resolvable:$true] %s977
      %983 = dma.vmem_to_hbm [thread:$0]  %s976, 256, %s978, [#allocation10], 128, 128, 8
    $region33: #{tpu_custom_call.1} parent=1 // pred_fallthru
      _
    // Predicated region
    $region34: #{tpu_custom_call.1} parent=1 // pred_check
      _
    $region35: #{tpu_custom_call.1} parent=1 // pred_check_branch
      %985 = sbr.rel (0) target = $region37
    $region36: #{tpu_custom_call.1} parent=1 // pred_region
      %987 = dma.done [#allocation4], 512
    $region37: #{tpu_custom_call.1} parent=1 // pred_fallthru
      _
    // Predicated region
    $region38: #{tpu_custom_call.1} parent=1 // pred_check
      _
    $region39: #{tpu_custom_call.1} parent=1 // pred_check_branch
      %989 = sbr.rel (0) target = $region41
    $region40: #{tpu_custom_call.1} parent=1 // pred_region
      %991 = dma.done [#allocation10], 256
    $region41: #{tpu_custom_call.1} parent=1 // pred_fallthru
      _
    %992 = vsyncpa [#allocation3], 1
    %993 = vsyncpa [#allocation6], 1
    %994 = vsyncpa [#allocation4], 1
    %995 = vsyncpa [#allocation10], 1

</llo_original>
